<compile_context>
chip_gen: v7x
topology: tpu7x:2x2x1
jax: 0.10.0
libtpu: 0.0.40
codegen_flags: <defaults>
</compile_context>

<pallas_src>
import functools
import math

import jax
import jax.numpy as jnp
from jax.experimental import pallas as pl
from jax.experimental.pallas import tpu as pltpu


# ------------------------------ in-kernel helpers --------------------------- #

def _layernorm(h, g, b, eps):
    # LayerNorm over last dim, statistics in f32, elementwise affine.
    mu = jnp.mean(h, axis=-1, keepdims=True)
    d = h - mu
    var = jnp.mean(d * d, axis=-1, keepdims=True)
    return d * jax.lax.rsqrt(var + eps) * g + b


def _mm(a, w, b=None):
    # bf16 MXU operands, f32 accumulation.
    y = jnp.dot(a.astype(jnp.bfloat16), w.astype(jnp.bfloat16),
                preferred_element_type=jnp.float32)
    if b is not None:
        y = y + b
    return y


# ----------------------------- fused Pallas kernel -------------------------- #

def _fused_transformer_kernel(
        x_ref, pe_ref, w_in_ref, b_in_ref,
        w_qkv_ref, b_qkv_ref, w_o_ref, b_o_ref,
        ln1_g_ref, ln1_b_ref, w_ff1_ref, b_ff1_ref,
        w_ff2_ref, b_ff2_ref, ln2_g_ref, ln2_b_ref,
        cls_g_ref, cls_b_ref, w_cls_ref, b_cls_ref,
        o_ref, h_scr, *, num_heads, eps):
    layer = pl.program_id(0)
    B, S, H = h_scr.shape
    Dh = H // num_heads
    scale = 1.0 / math.sqrt(Dh)

    # --- first layer step: input projection + positional encoding (fused) --- #
    @pl.when(layer == 0)
    def _():
        Din = x_ref.shape[-1]
        h = _mm(x_ref[...].reshape(B * S, Din), w_in_ref[...], b_in_ref[...])
        h_scr[...] = h.reshape(B, S, H) + pe_ref[...]          # (S,H) broadcasts over B

    x = h_scr[...]                                             # (B,S,H) f32, VMEM-resident

    # --- self-attention: QKV on flattened rows, per-head softmax, one out-proj matmul --- #
    qkv = _mm(x.reshape(B * S, H), w_qkv_ref[...], b_qkv_ref[...]).reshape(B, S, 3 * H)
    q = (qkv[:, :, 0:H] * scale).astype(jnp.bfloat16)
    k = qkv[:, :, H:2 * H].astype(jnp.bfloat16)
    v = qkv[:, :, 2 * H:3 * H].astype(jnp.bfloat16)

    head_outs = []
    for hi in range(num_heads):                                # small static head count
        sl = slice(hi * Dh, (hi + 1) * Dh)
        s = jnp.einsum('bqd,bkd->bqk', q[:, :, sl], k[:, :, sl],
                       preferred_element_type=jnp.float32)     # (B,S,S) f32
        s = s - jnp.max(s, axis=-1, keepdims=True)
        p = jnp.exp(s)
        p = p * pl.reciprocal(jnp.sum(p, axis=-1, keepdims=True), approx=True)
        head_outs.append(jnp.einsum('bqk,bkd->bqd', p.astype(jnp.bfloat16), v[:, :, sl],
                                    preferred_element_type=jnp.float32))
    heads = jnp.concatenate(head_outs, axis=-1)                # (B,S,H) f32 slab
    attn = _mm(heads.reshape(B * S, H), w_o_ref[...], b_o_ref[...]).reshape(B, S, H)

    # --- post-norm residual 1 --- #
    h1 = _layernorm(x + attn, ln1_g_ref[...], ln1_b_ref[...], eps)

    # --- feed-forward (ReLU) on flattened rows, post-norm residual 2 --- #
    h1_2d = h1.reshape(B * S, H)
    ff = jnp.maximum(_mm(h1_2d, w_ff1_ref[...], b_ff1_ref[...]), 0.0)
    ff = _mm(ff, w_ff2_ref[...], b_ff2_ref[...])
    h2 = _layernorm(h1_2d + ff, ln2_g_ref[...], ln2_b_ref[...], eps).reshape(B, S, H)
    h_scr[...] = h2                                            # carry to next layer step

    # --- last layer step: seq-mean -> LayerNorm -> (Dropout=id) -> classifier --- #
    @pl.when(layer == pl.num_programs(0) - 1)
    def _():
        pooled = jnp.mean(h2, axis=1)                          # (B,H)
        ln = _layernorm(pooled, cls_g_ref[...], cls_b_ref[...], eps)
        o_ref[...] = _mm(ln, w_cls_ref[...], b_cls_ref[...])


# ----------------------------- thin wrapper --------------------------------- #

def _vmem_budget_bytes(const_args, layer_args, head_args, B, S, H, C, L):
    nbytes = lambda a: a.size * a.dtype.itemsize
    # Pipeline blocks are double-buffered by default.
    blocks = 2 * (sum(nbytes(a) for a in const_args + head_args)
                  + sum(nbytes(a) // L for a in layer_args))
    scratch = B * S * H * 4 + B * C * 4                        # activation carry + output block
    live = B * S * (3 * H + 4 * H + 3 * H) * 4 + B * S * S * 4  # qkv / ffn / attn temporaries
    est = blocks + scratch + live
    # Headroom for spills & Mosaic internal scratch; never below the 32 MiB default,
    # capped at v7x's 64 MiB physical VMEM.
    return int(min(64 << 20, max(2 * est + (8 << 20), 32 << 20)))


def transformer_classifier(x, params, num_heads, eps=1e-5):
    B, S, _ = x.shape
    H = params["w_in"].shape[1]
    C = params["w_cls"].shape[1]
    L = params["w_qkv"].shape[0]
    assert H % num_heads == 0
    pe = params["pe"][:S]

    const_args = (x, pe, params["w_in"], params["b_in"])
    layer_args = tuple(params[n] for n in
                       ("w_qkv", "b_qkv", "w_o", "b_o", "ln1_g", "ln1_b",
                        "w_ff1", "b_ff1", "w_ff2", "b_ff2", "ln2_g", "ln2_b"))
    head_args = (params["cls_g"], params["cls_b"], params["w_cls"], params["b_cls"])

    def const_spec(a):                       # constant block index -> DMA'd once, resident
        zeros = (0,) * a.ndim
        return pl.BlockSpec(a.shape, lambda l: zeros)

    def layer_spec(a):                       # leading L axis selected by the layer grid index
        return pl.BlockSpec((None,) + a.shape[1:], lambda l: (l, 0, 0))

    in_specs = ([const_spec(a) for a in const_args]
                + [layer_spec(a) for a in layer_args]
                + [const_spec(a) for a in head_args])

    vmem_limit = _vmem_budget_bytes(const_args, layer_args, head_args, B, S, H, C, L)

    return pl.pallas_call(
        functools.partial(_fused_transformer_kernel, num_heads=num_heads, eps=eps),
        out_shape=jax.ShapeDtypeStruct((B, C), jnp.float32),
        grid=(L,),
        in_specs=in_specs,
        out_specs=pl.BlockSpec((B, C), lambda l: (0, 0)),
        scratch_shapes=[pltpu.VMEM((B, S, H), jnp.float32)],
        compiler_params=pltpu.CompilerParams(
            dimension_semantics=("arbitrary",),
            vmem_limit_bytes=vmem_limit),
    )(*const_args, *layer_args, *head_args)


# ------------------------- deterministic parameters ------------------------ #

def _linear_init(key, fin, fout):
    kw, kb = jax.random.split(key)
    lim = 1.0 / math.sqrt(fin)
    w = jax.random.uniform(kw, (fin, fout), jnp.float32, -lim, lim).astype(jnp.bfloat16)
    b = jax.random.uniform(kb, (1, fout), jnp.float32, -lim, lim)
    return w, b


def init_params(key, input_size, hidden, num_layers, num_classes, max_len=64):
    keys = jax.random.split(key, 2 + num_layers)
    params = {}
    params["w_in"], params["b_in"] = _linear_init(keys[0], input_size, hidden)

    position = jnp.arange(max_len, dtype=jnp.float32)[:, None]
    div_term = jnp.exp(jnp.arange(0, hidden, 2, dtype=jnp.float32)
                       * (-math.log(10000.0) / hidden))
    pe = jnp.zeros((max_len, hidden), jnp.float32)
    pe = pe.at[:, 0::2].set(jnp.sin(position * div_term))
    pe = pe.at[:, 1::2].set(jnp.cos(position * div_term))
    params["pe"] = pe

    per_layer = []
    for i in range(num_layers):
        lk = jax.random.split(keys[1 + i], 4)
        w_qkv, b_qkv = _linear_init(lk[0], hidden, 3 * hidden)
        w_o, b_o = _linear_init(lk[1], hidden, hidden)
        w_ff1, b_ff1 = _linear_init(lk[2], hidden, 4 * hidden)
        w_ff2, b_ff2 = _linear_init(lk[3], 4 * hidden, hidden)
        per_layer.append(dict(
            w_qkv=w_qkv, b_qkv=b_qkv, w_o=w_o, b_o=b_o,
            ln1_g=jnp.ones((1, hidden), jnp.float32),
            ln1_b=jnp.zeros((1, hidden), jnp.float32),
            w_ff1=w_ff1, b_ff1=b_ff1, w_ff2=w_ff2, b_ff2=b_ff2,
            ln2_g=jnp.ones((1, hidden), jnp.float32),
            ln2_b=jnp.zeros((1, hidden), jnp.float32)))
    # Stack per-layer params along a leading L axis: one pallas_call grids over layers
    # and the pipeline prefetches layer l+1 weights while layer l computes.
    for name in per_layer[0]:
        params[name] = jnp.stack([lp[name] for lp in per_layer], axis=0)

    params["cls_g"] = jnp.ones((1, hidden), jnp.float32)
    params["cls_b"] = jnp.zeros((1, hidden), jnp.float32)
    params["w_cls"], params["b_cls"] = _linear_init(keys[-1], hidden, num_classes)
    return params


# ----------------------------------- main ----------------------------------- #

if __name__ == "__main__":
    BATCH, SEQ, INPUT_SIZE = 2, 8, 16
    HIDDEN, NUM_LAYERS, NUM_HEADS, NUM_CLASSES = 32, 2, 4, 5

    key = jax.random.PRNGKey(0)
    k_x, k_p = jax.random.split(key)
    x = jax.random.normal(k_x, (BATCH, SEQ, INPUT_SIZE), jnp.float32)
    params = init_params(k_p, INPUT_SIZE, HIDDEN, NUM_LAYERS, NUM_CLASSES)

    fwd = jax.jit(functools.partial(transformer_classifier, num_heads=NUM_HEADS))
    logits = jax.block_until_ready(fwd(x, params))
    assert logits.shape == (BATCH, NUM_CLASSES)
    assert bool(jnp.all(jnp.isfinite(logits)))
    print("KERNEL_OK")
</pallas_src>

<mosaic_0001>
module attributes {stable_mosaic.version = 11 : i64} {
  func.func @_fused_transformer_kernel(%arg0: i32, %arg1: memref<2x8x16xf32, #tpu.memory_space<vmem>>, %arg2: memref<8x32xf32, #tpu.memory_space<vmem>>, %arg3: memref<16x32xbf16, #tpu.memory_space<vmem>>, %arg4: memref<1x32xf32, #tpu.memory_space<vmem>>, %arg5: memref<1x32x96xbf16, #tpu.memory_space<vmem>>, %arg6: memref<1x1x96xf32, #tpu.memory_space<vmem>>, %arg7: memref<1x32x32xbf16, #tpu.memory_space<vmem>>, %arg8: memref<1x1x32xf32, #tpu.memory_space<vmem>>, %arg9: memref<1x1x32xf32, #tpu.memory_space<vmem>>, %arg10: memref<1x1x32xf32, #tpu.memory_space<vmem>>, %arg11: memref<1x32x128xbf16, #tpu.memory_space<vmem>>, %arg12: memref<1x1x128xf32, #tpu.memory_space<vmem>>, %arg13: memref<1x128x32xbf16, #tpu.memory_space<vmem>>, %arg14: memref<1x1x32xf32, #tpu.memory_space<vmem>>, %arg15: memref<1x1x32xf32, #tpu.memory_space<vmem>>, %arg16: memref<1x1x32xf32, #tpu.memory_space<vmem>>, %arg17: memref<1x32xf32, #tpu.memory_space<vmem>>, %arg18: memref<1x32xf32, #tpu.memory_space<vmem>>, %arg19: memref<32x5xbf16, #tpu.memory_space<vmem>>, %arg20: memref<1x5xf32, #tpu.memory_space<vmem>>, %arg21: memref<2x5xf32, #tpu.memory_space<vmem>>, %arg22: memref<2x8x32xf32, #tpu.memory_space<vmem>>) attributes {dimension_semantics = [#tpu.dimension_semantics<arbitrary>], iteration_bounds = array<i64: 2>, scalar_prefetch = 0 : i64, scratch_operands = 1 : i64, tpu.core_type = #tpu.core_type<tc>, window_params = [{pipeline_mode = #tpu.pipeline_mode<synchronous>, transform_indices = @transform_0, window_bounds = array<i64: 2, 8, 16>}, {pipeline_mode = #tpu.pipeline_mode<synchronous>, transform_indices = @transform_1, window_bounds = array<i64: 8, 32>}, {pipeline_mode = #tpu.pipeline_mode<synchronous>, transform_indices = @transform_2, window_bounds = array<i64: 16, 32>}, {pipeline_mode = #tpu.pipeline_mode<synchronous>, transform_indices = @transform_3, window_bounds = array<i64: 1, 32>}, {transform_indices = @transform_4, window_bounds = array<i64: 1, 32, 96>}, {transform_indices = @transform_5, window_bounds = array<i64: 1, 1, 96>}, {transform_indices = @transform_6, window_bounds = array<i64: 1, 32, 32>}, {transform_indices = @transform_7, window_bounds = array<i64: 1, 1, 32>}, {transform_indices = @transform_8, window_bounds = array<i64: 1, 1, 32>}, {transform_indices = @transform_9, window_bounds = array<i64: 1, 1, 32>}, {transform_indices = @transform_10, window_bounds = array<i64: 1, 32, 128>}, {transform_indices = @transform_11, window_bounds = array<i64: 1, 1, 128>}, {transform_indices = @transform_12, window_bounds = array<i64: 1, 128, 32>}, {transform_indices = @transform_13, window_bounds = array<i64: 1, 1, 32>}, {transform_indices = @transform_14, window_bounds = array<i64: 1, 1, 32>}, {transform_indices = @transform_15, window_bounds = array<i64: 1, 1, 32>}, {pipeline_mode = #tpu.pipeline_mode<synchronous>, transform_indices = @transform_16, window_bounds = array<i64: 1, 32>}, {pipeline_mode = #tpu.pipeline_mode<synchronous>, transform_indices = @transform_17, window_bounds = array<i64: 1, 32>}, {pipeline_mode = #tpu.pipeline_mode<synchronous>, transform_indices = @transform_18, window_bounds = array<i64: 32, 5>}, {pipeline_mode = #tpu.pipeline_mode<synchronous>, transform_indices = @transform_19, window_bounds = array<i64: 1, 5>}, {pipeline_mode = #tpu.pipeline_mode<synchronous>, transform_indices = @transform_20, window_bounds = array<i64: 2, 5>}]} {
    %c0_i32 = arith.constant 0 : i32
    %0 = arith.cmpi eq, %arg0, %c0_i32 : i32
    %1 = arith.extui %0 : i1 to i32
    %c0_i32_0 = arith.constant 0 : i32
    %2 = arith.cmpi ne, %1, %c0_i32_0 : i32
    scf.if %2 {
      %c0_74 = arith.constant 0 : index
      %c0_75 = arith.constant 0 : index
      %c0_76 = arith.constant 0 : index
      %173 = vector.load %arg1[%c0_74, %c0_75, %c0_76] : memref<2x8x16xf32, #tpu.memory_space<vmem>>, vector<2x8x16xf32>
      %174 = vector.shape_cast %173 : vector<2x8x16xf32> to vector<16x16xf32>
      %c0_77 = arith.constant 0 : index
      %c0_78 = arith.constant 0 : index
      %175 = vector.load %arg3[%c0_77, %c0_78] : memref<16x32xbf16, #tpu.memory_space<vmem>>, vector<16x32xbf16>
      %c0_79 = arith.constant 0 : index
      %c0_80 = arith.constant 0 : index
      %176 = vector.load %arg4[%c0_79, %c0_80] : memref<1x32xf32, #tpu.memory_space<vmem>>, vector<1x32xf32>
      %177 = arith.truncf %174 : vector<16x16xf32> to vector<16x16xbf16>
      %cst_81 = arith.constant dense<0.000000e+00> : vector<16x32xf32>
      %178 = tpu.matmul %177, %175, %cst_81 {dimension_numbers = #tpu.dot_dimension_numbers<[1], [0], [0], [1], [0, 0, 1, 1], [], []>} : vector<16x16xbf16>, vector<16x32xbf16>, vector<16x32xf32> -> vector<16x32xf32>
      %179 = vector.broadcast %176 : vector<1x32xf32> to vector<16x32xf32>
      %180 = arith.addf %178, %179 : vector<16x32xf32>
      %181 = vector.shape_cast %180 : vector<16x32xf32> to vector<2x8x32xf32>
      %c0_82 = arith.constant 0 : index
      %c0_83 = arith.constant 0 : index
      %182 = vector.load %arg2[%c0_82, %c0_83] : memref<8x32xf32, #tpu.memory_space<vmem>>, vector<8x32xf32>
      %183 = vector.shape_cast %182 : vector<8x32xf32> to vector<1x8x32xf32>
      %184 = vector.broadcast %183 : vector<1x8x32xf32> to vector<2x8x32xf32>
      %185 = arith.addf %181, %184 : vector<2x8x32xf32>
      %c0_84 = arith.constant 0 : index
      %c0_85 = arith.constant 0 : index
      %c0_86 = arith.constant 0 : index
      %186 = vector.load %arg22[%c0_84, %c0_85, %c0_86] : memref<2x8x32xf32, #tpu.memory_space<vmem>>, vector<2x8x32xf32>
      tpu.vector_store %arg22[%c0_84, %c0_85, %c0_86], %185 {strides = array<i32>} : memref<2x8x32xf32, #tpu.memory_space<vmem>>, vector<2x8x32xf32>,
    } else {
    }
    %c0 = arith.constant 0 : index
    %c0_1 = arith.constant 0 : index
    %c0_2 = arith.constant 0 : index
    %3 = vector.load %arg22[%c0, %c0_1, %c0_2] : memref<2x8x32xf32, #tpu.memory_space<vmem>>, vector<2x8x32xf32>
    %4 = vector.shape_cast %3 : vector<2x8x32xf32> to vector<16x32xf32>
    %c0_3 = arith.constant 0 : index
    %c0_4 = arith.constant 0 : index
    %c0_5 = arith.constant 0 : index
    %5 = vector.load %arg5[%c0_3, %c0_4, %c0_5] : memref<1x32x96xbf16, #tpu.memory_space<vmem>>, vector<1x32x96xbf16>
    %6 = vector.shape_cast %5 : vector<1x32x96xbf16> to vector<32x96xbf16>
    %c0_6 = arith.constant 0 : index
    %c0_7 = arith.constant 0 : index
    %c0_8 = arith.constant 0 : index
    %7 = vector.load %arg6[%c0_6, %c0_7, %c0_8] : memref<1x1x96xf32, #tpu.memory_space<vmem>>, vector<1x1x96xf32>
    %8 = vector.shape_cast %7 : vector<1x1x96xf32> to vector<1x96xf32>
    %9 = arith.truncf %4 : vector<16x32xf32> to vector<16x32xbf16>
    %cst = arith.constant dense<0.000000e+00> : vector<16x96xf32>
    %10 = tpu.matmul %9, %6, %cst {dimension_numbers = #tpu.dot_dimension_numbers<[1], [0], [0], [1], [0, 0, 1, 1], [], []>} : vector<16x32xbf16>, vector<32x96xbf16>, vector<16x96xf32> -> vector<16x96xf32>
    %11 = vector.broadcast %8 : vector<1x96xf32> to vector<16x96xf32>
    %12 = arith.addf %10, %11 : vector<16x96xf32>
    %13 = vector.shape_cast %12 : vector<16x96xf32> to vector<2x8x96xf32>
    %14 = vector.extract_strided_slice %13 {offsets = [0, 0, 0], sizes = [2, 8, 32], strides = [1, 1, 1]} : vector<2x8x96xf32> to vector<2x8x32xf32>
    %cst_9 = arith.constant 0.353553385 : f32
    %15 = vector.broadcast %cst_9 : f32 to vector<2x8x32xf32>
    %16 = arith.mulf %14, %15 : vector<2x8x32xf32>
    %17 = arith.truncf %16 : vector<2x8x32xf32> to vector<2x8x32xbf16>
    %18 = vector.extract_strided_slice %13 {offsets = [0, 0, 32], sizes = [2, 8, 32], strides = [1, 1, 1]} : vector<2x8x96xf32> to vector<2x8x32xf32>
    %19 = arith.truncf %18 : vector<2x8x32xf32> to vector<2x8x32xbf16>
    %20 = vector.extract_strided_slice %13 {offsets = [0, 0, 64], sizes = [2, 8, 32], strides = [1, 1, 1]} : vector<2x8x96xf32> to vector<2x8x32xf32>
    %21 = arith.truncf %20 : vector<2x8x32xf32> to vector<2x8x32xbf16>
    %22 = vector.extract_strided_slice %17 {offsets = [0, 0, 0], sizes = [2, 8, 8], strides = [1, 1, 1]} : vector<2x8x32xbf16> to vector<2x8x8xbf16>
    %23 = vector.extract_strided_slice %19 {offsets = [0, 0, 0], sizes = [2, 8, 8], strides = [1, 1, 1]} : vector<2x8x32xbf16> to vector<2x8x8xbf16>
    "tpu.trace_start"() <{level = 10 : i32, message = "bqd,bkd->bqk"}> : () -> ()
    %cst_10 = arith.constant dense<0.000000e+00> : vector<2x8x8xf32>
    %24 = tpu.matmul %22, %23, %cst_10 {dimension_numbers = #tpu.dot_dimension_numbers<[2], [2], [1], [1], [0, 0, 0, 1, 1, 1], [0], [0]>} : vector<2x8x8xbf16>, vector<2x8x8xbf16>, vector<2x8x8xf32> -> vector<2x8x8xf32>
    "tpu.trace_stop"() : () -> ()
    %cst_11 = arith.constant dense<0xFF800000> : vector<2x8xf32>
    %25 = vector.multi_reduction <maximumf>, %24, %cst_11 [2] : vector<2x8x8xf32> to vector<2x8xf32>
    %26 = vector.shape_cast %25 : vector<2x8xf32> to vector<2x8x1xf32>
    %27 = vector.broadcast %26 : vector<2x8x1xf32> to vector<2x8x8xf32>
    %28 = arith.subf %24, %27 : vector<2x8x8xf32>
    %29 = math.exp %28 : vector<2x8x8xf32>
    %cst_12 = arith.constant dense<0.000000e+00> : vector<2x8xf32>
    %30 = vector.multi_reduction <add>, %29, %cst_12 [2] : vector<2x8x8xf32> to vector<2x8xf32>
    %31 = vector.shape_cast %30 : vector<2x8xf32> to vector<2x8x1xf32>
    %32 = tpu.reciprocal %31 {approx = true} : vector<2x8x1xf32> -> vector<2x8x1xf32>
    %33 = vector.broadcast %32 : vector<2x8x1xf32> to vector<2x8x8xf32>
    %34 = arith.mulf %29, %33 : vector<2x8x8xf32>
    %35 = arith.truncf %34 : vector<2x8x8xf32> to vector<2x8x8xbf16>
    %36 = vector.extract_strided_slice %21 {offsets = [0, 0, 0], sizes = [2, 8, 8], strides = [1, 1, 1]} : vector<2x8x32xbf16> to vector<2x8x8xbf16>
    "tpu.trace_start"() <{level = 10 : i32, message = "bqk,bkd->bqd"}> : () -> ()
    %cst_13 = arith.constant dense<0.000000e+00> : vector<2x8x8xf32>
    %37 = tpu.matmul %35, %36, %cst_13 {dimension_numbers = #tpu.dot_dimension_numbers<[2], [1], [1], [2], [0, 0, 0, 1, 1, 2], [0], [0]>} : vector<2x8x8xbf16>, vector<2x8x8xbf16>, vector<2x8x8xf32> -> vector<2x8x8xf32>
    "tpu.trace_stop"() : () -> ()
    %38 = vector.extract_strided_slice %17 {offsets = [0, 0, 8], sizes = [2, 8, 8], strides = [1, 1, 1]} : vector<2x8x32xbf16> to vector<2x8x8xbf16>
    %39 = vector.extract_strided_slice %19 {offsets = [0, 0, 8], sizes = [2, 8, 8], strides = [1, 1, 1]} : vector<2x8x32xbf16> to vector<2x8x8xbf16>
    "tpu.trace_start"() <{level = 10 : i32, message = "bqd,bkd->bqk"}> : () -> ()
    %cst_14 = arith.constant dense<0.000000e+00> : vector<2x8x8xf32>
    %40 = tpu.matmul %38, %39, %cst_14 {dimension_numbers = #tpu.dot_dimension_numbers<[2], [2], [1], [1], [0, 0, 0, 1, 1, 1], [0], [0]>} : vector<2x8x8xbf16>, vector<2x8x8xbf16>, vector<2x8x8xf32> -> vector<2x8x8xf32>
    "tpu.trace_stop"() : () -> ()
    %cst_15 = arith.constant dense<0xFF800000> : vector<2x8xf32>
    %41 = vector.multi_reduction <maximumf>, %40, %cst_15 [2] : vector<2x8x8xf32> to vector<2x8xf32>
    %42 = vector.shape_cast %41 : vector<2x8xf32> to vector<2x8x1xf32>
    %43 = vector.broadcast %42 : vector<2x8x1xf32> to vector<2x8x8xf32>
    %44 = arith.subf %40, %43 : vector<2x8x8xf32>
    %45 = math.exp %44 : vector<2x8x8xf32>
    %cst_16 = arith.constant dense<0.000000e+00> : vector<2x8xf32>
    %46 = vector.multi_reduction <add>, %45, %cst_16 [2] : vector<2x8x8xf32> to vector<2x8xf32>
    %47 = vector.shape_cast %46 : vector<2x8xf32> to vector<2x8x1xf32>
    %48 = tpu.reciprocal %47 {approx = true} : vector<2x8x1xf32> -> vector<2x8x1xf32>
    %49 = vector.broadcast %48 : vector<2x8x1xf32> to vector<2x8x8xf32>
    %50 = arith.mulf %45, %49 : vector<2x8x8xf32>
    %51 = arith.truncf %50 : vector<2x8x8xf32> to vector<2x8x8xbf16>
    %52 = vector.extract_strided_slice %21 {offsets = [0, 0, 8], sizes = [2, 8, 8], strides = [1, 1, 1]} : vector<2x8x32xbf16> to vector<2x8x8xbf16>
    "tpu.trace_start"() <{level = 10 : i32, message = "bqk,bkd->bqd"}> : () -> ()
    %cst_17 = arith.constant dense<0.000000e+00> : vector<2x8x8xf32>
    %53 = tpu.matmul %51, %52, %cst_17 {dimension_numbers = #tpu.dot_dimension_numbers<[2], [1], [1], [2], [0, 0, 0, 1, 1, 2], [0], [0]>} : vector<2x8x8xbf16>, vector<2x8x8xbf16>, vector<2x8x8xf32> -> vector<2x8x8xf32>
    "tpu.trace_stop"() : () -> ()
    %54 = vector.extract_strided_slice %17 {offsets = [0, 0, 16], sizes = [2, 8, 8], strides = [1, 1, 1]} : vector<2x8x32xbf16> to vector<2x8x8xbf16>
    %55 = vector.extract_strided_slice %19 {offsets = [0, 0, 16], sizes = [2, 8, 8], strides = [1, 1, 1]} : vector<2x8x32xbf16> to vector<2x8x8xbf16>
    "tpu.trace_start"() <{level = 10 : i32, message = "bqd,bkd->bqk"}> : () -> ()
    %cst_18 = arith.constant dense<0.000000e+00> : vector<2x8x8xf32>
    %56 = tpu.matmul %54, %55, %cst_18 {dimension_numbers = #tpu.dot_dimension_numbers<[2], [2], [1], [1], [0, 0, 0, 1, 1, 1], [0], [0]>} : vector<2x8x8xbf16>, vector<2x8x8xbf16>, vector<2x8x8xf32> -> vector<2x8x8xf32>
    "tpu.trace_stop"() : () -> ()
    %cst_19 = arith.constant dense<0xFF800000> : vector<2x8xf32>
    %57 = vector.multi_reduction <maximumf>, %56, %cst_19 [2] : vector<2x8x8xf32> to vector<2x8xf32>
    %58 = vector.shape_cast %57 : vector<2x8xf32> to vector<2x8x1xf32>
    %59 = vector.broadcast %58 : vector<2x8x1xf32> to vector<2x8x8xf32>
    %60 = arith.subf %56, %59 : vector<2x8x8xf32>
    %61 = math.exp %60 : vector<2x8x8xf32>
    %cst_20 = arith.constant dense<0.000000e+00> : vector<2x8xf32>
    %62 = vector.multi_reduction <add>, %61, %cst_20 [2] : vector<2x8x8xf32> to vector<2x8xf32>
    %63 = vector.shape_cast %62 : vector<2x8xf32> to vector<2x8x1xf32>
    %64 = tpu.reciprocal %63 {approx = true} : vector<2x8x1xf32> -> vector<2x8x1xf32>
    %65 = vector.broadcast %64 : vector<2x8x1xf32> to vector<2x8x8xf32>
    %66 = arith.mulf %61, %65 : vector<2x8x8xf32>
    %67 = arith.truncf %66 : vector<2x8x8xf32> to vector<2x8x8xbf16>
    %68 = vector.extract_strided_slice %21 {offsets = [0, 0, 16], sizes = [2, 8, 8], strides = [1, 1, 1]} : vector<2x8x32xbf16> to vector<2x8x8xbf16>
    "tpu.trace_start"() <{level = 10 : i32, message = "bqk,bkd->bqd"}> : () -> ()
    %cst_21 = arith.constant dense<0.000000e+00> : vector<2x8x8xf32>
    %69 = tpu.matmul %67, %68, %cst_21 {dimension_numbers = #tpu.dot_dimension_numbers<[2], [1], [1], [2], [0, 0, 0, 1, 1, 2], [0], [0]>} : vector<2x8x8xbf16>, vector<2x8x8xbf16>, vector<2x8x8xf32> -> vector<2x8x8xf32>
    "tpu.trace_stop"() : () -> ()
    %70 = vector.extract_strided_slice %17 {offsets = [0, 0, 24], sizes = [2, 8, 8], strides = [1, 1, 1]} : vector<2x8x32xbf16> to vector<2x8x8xbf16>
    %71 = vector.extract_strided_slice %19 {offsets = [0, 0, 24], sizes = [2, 8, 8], strides = [1, 1, 1]} : vector<2x8x32xbf16> to vector<2x8x8xbf16>
    "tpu.trace_start"() <{level = 10 : i32, message = "bqd,bkd->bqk"}> : () -> ()
    %cst_22 = arith.constant dense<0.000000e+00> : vector<2x8x8xf32>
    %72 = tpu.matmul %70, %71, %cst_22 {dimension_numbers = #tpu.dot_dimension_numbers<[2], [2], [1], [1], [0, 0, 0, 1, 1, 1], [0], [0]>} : vector<2x8x8xbf16>, vector<2x8x8xbf16>, vector<2x8x8xf32> -> vector<2x8x8xf32>
    "tpu.trace_stop"() : () -> ()
    %cst_23 = arith.constant dense<0xFF800000> : vector<2x8xf32>
    %73 = vector.multi_reduction <maximumf>, %72, %cst_23 [2] : vector<2x8x8xf32> to vector<2x8xf32>
    %74 = vector.shape_cast %73 : vector<2x8xf32> to vector<2x8x1xf32>
    %75 = vector.broadcast %74 : vector<2x8x1xf32> to vector<2x8x8xf32>
    %76 = arith.subf %72, %75 : vector<2x8x8xf32>
    %77 = math.exp %76 : vector<2x8x8xf32>
    %cst_24 = arith.constant dense<0.000000e+00> : vector<2x8xf32>
    %78 = vector.multi_reduction <add>, %77, %cst_24 [2] : vector<2x8x8xf32> to vector<2x8xf32>
    %79 = vector.shape_cast %78 : vector<2x8xf32> to vector<2x8x1xf32>
    %80 = tpu.reciprocal %79 {approx = true} : vector<2x8x1xf32> -> vector<2x8x1xf32>
    %81 = vector.broadcast %80 : vector<2x8x1xf32> to vector<2x8x8xf32>
    %82 = arith.mulf %77, %81 : vector<2x8x8xf32>
    %83 = arith.truncf %82 : vector<2x8x8xf32> to vector<2x8x8xbf16>
    %84 = vector.extract_strided_slice %21 {offsets = [0, 0, 24], sizes = [2, 8, 8], strides = [1, 1, 1]} : vector<2x8x32xbf16> to vector<2x8x8xbf16>
    "tpu.trace_start"() <{level = 10 : i32, message = "bqk,bkd->bqd"}> : () -> ()
    %cst_25 = arith.constant dense<0.000000e+00> : vector<2x8x8xf32>
    %85 = tpu.matmul %83, %84, %cst_25 {dimension_numbers = #tpu.dot_dimension_numbers<[2], [1], [1], [2], [0, 0, 0, 1, 1, 2], [0], [0]>} : vector<2x8x8xbf16>, vector<2x8x8xbf16>, vector<2x8x8xf32> -> vector<2x8x8xf32>
    "tpu.trace_stop"() : () -> ()
    %86 = tpu.concatenate %37, %53, %69, %85 in 2 : vector<2x8x8xf32>, vector<2x8x8xf32>, vector<2x8x8xf32>, vector<2x8x8xf32> -> vector<2x8x32xf32>
    %87 = vector.shape_cast %86 : vector<2x8x32xf32> to vector<16x32xf32>
    %c0_26 = arith.constant 0 : index
    %c0_27 = arith.constant 0 : index
    %c0_28 = arith.constant 0 : index
    %88 = vector.load %arg7[%c0_26, %c0_27, %c0_28] : memref<1x32x32xbf16, #tpu.memory_space<vmem>>, vector<1x32x32xbf16>
    %89 = vector.shape_cast %88 : vector<1x32x32xbf16> to vector<32x32xbf16>
    %c0_29 = arith.constant 0 : index
    %c0_30 = arith.constant 0 : index
    %c0_31 = arith.constant 0 : index
    %90 = vector.load %arg8[%c0_29, %c0_30, %c0_31] : memref<1x1x32xf32, #tpu.memory_space<vmem>>, vector<1x1x32xf32>
    %91 = vector.shape_cast %90 : vector<1x1x32xf32> to vector<1x32xf32>
    %92 = arith.truncf %87 : vector<16x32xf32> to vector<16x32xbf16>
    %cst_32 = arith.constant dense<0.000000e+00> : vector<16x32xf32>
    %93 = tpu.matmul %92, %89, %cst_32 {dimension_numbers = #tpu.dot_dimension_numbers<[1], [0], [0], [1], [0, 0, 1, 1], [], []>} : vector<16x32xbf16>, vector<32x32xbf16>, vector<16x32xf32> -> vector<16x32xf32>
    %94 = vector.broadcast %91 : vector<1x32xf32> to vector<16x32xf32>
    %95 = arith.addf %93, %94 : vector<16x32xf32>
    %96 = vector.shape_cast %95 : vector<16x32xf32> to vector<2x8x32xf32>
    %97 = arith.addf %3, %96 : vector<2x8x32xf32>
    %c0_33 = arith.constant 0 : index
    %c0_34 = arith.constant 0 : index
    %c0_35 = arith.constant 0 : index
    %98 = vector.load %arg9[%c0_33, %c0_34, %c0_35] : memref<1x1x32xf32, #tpu.memory_space<vmem>>, vector<1x1x32xf32>
    %99 = vector.shape_cast %98 : vector<1x1x32xf32> to vector<1x32xf32>
    %c0_36 = arith.constant 0 : index
    %c0_37 = arith.constant 0 : index
    %c0_38 = arith.constant 0 : index
    %100 = vector.load %arg10[%c0_36, %c0_37, %c0_38] : memref<1x1x32xf32, #tpu.memory_space<vmem>>, vector<1x1x32xf32>
    %101 = vector.shape_cast %100 : vector<1x1x32xf32> to vector<1x32xf32>
    %cst_39 = arith.constant dense<0.000000e+00> : vector<2x8xf32>
    %102 = vector.multi_reduction <add>, %97, %cst_39 [2] : vector<2x8x32xf32> to vector<2x8xf32>
    %103 = vector.shape_cast %102 : vector<2x8xf32> to vector<2x8x1xf32>
    %cst_40 = arith.constant 3.200000e+01 : f32
    %104 = vector.broadcast %cst_40 : f32 to vector<2x8x1xf32>
    %105 = arith.divf %103, %104 : vector<2x8x1xf32>
    %106 = vector.broadcast %105 : vector<2x8x1xf32> to vector<2x8x32xf32>
    %107 = arith.subf %97, %106 : vector<2x8x32xf32>
    %108 = arith.mulf %107, %107 : vector<2x8x32xf32>
    %cst_41 = arith.constant dense<0.000000e+00> : vector<2x8xf32>
    %109 = vector.multi_reduction <add>, %108, %cst_41 [2] : vector<2x8x32xf32> to vector<2x8xf32>
    %110 = vector.shape_cast %109 : vector<2x8xf32> to vector<2x8x1xf32>
    %cst_42 = arith.constant 3.200000e+01 : f32
    %111 = vector.broadcast %cst_42 : f32 to vector<2x8x1xf32>
    %112 = arith.divf %110, %111 : vector<2x8x1xf32>
    %cst_43 = arith.constant 9.99999974E-6 : f32
    %113 = vector.broadcast %cst_43 : f32 to vector<2x8x1xf32>
    %114 = arith.addf %112, %113 : vector<2x8x1xf32>
    %115 = math.rsqrt %114 : vector<2x8x1xf32>
    %116 = vector.broadcast %115 : vector<2x8x1xf32> to vector<2x8x32xf32>
    %117 = arith.mulf %107, %116 : vector<2x8x32xf32>
    %118 = vector.shape_cast %99 : vector<1x32xf32> to vector<1x1x32xf32>
    %119 = vector.broadcast %118 : vector<1x1x32xf32> to vector<2x8x32xf32>
    %120 = arith.mulf %117, %119 : vector<2x8x32xf32>
    %121 = vector.shape_cast %101 : vector<1x32xf32> to vector<1x1x32xf32>
    %122 = vector.broadcast %121 : vector<1x1x32xf32> to vector<2x8x32xf32>
    %123 = arith.addf %120, %122 : vector<2x8x32xf32>
    %124 = vector.shape_cast %123 : vector<2x8x32xf32> to vector<16x32xf32>
    %c0_44 = arith.constant 0 : index
    %c0_45 = arith.constant 0 : index
    %c0_46 = arith.constant 0 : index
    %125 = vector.load %arg11[%c0_44, %c0_45, %c0_46] : memref<1x32x128xbf16, #tpu.memory_space<vmem>>, vector<1x32x128xbf16>
    %126 = vector.shape_cast %125 : vector<1x32x128xbf16> to vector<32x128xbf16>
    %c0_47 = arith.constant 0 : index
    %c0_48 = arith.constant 0 : index
    %c0_49 = arith.constant 0 : index
    %127 = vector.load %arg12[%c0_47, %c0_48, %c0_49] : memref<1x1x128xf32, #tpu.memory_space<vmem>>, vector<1x1x128xf32>
    %128 = vector.shape_cast %127 : vector<1x1x128xf32> to vector<1x128xf32>
    %129 = arith.truncf %124 : vector<16x32xf32> to vector<16x32xbf16>
    %cst_50 = arith.constant dense<0.000000e+00> : vector<16x128xf32>
    %130 = tpu.matmul %129, %126, %cst_50 {dimension_numbers = #tpu.dot_dimension_numbers<[1], [0], [0], [1], [0, 0, 1, 1], [], []>} : vector<16x32xbf16>, vector<32x128xbf16>, vector<16x128xf32> -> vector<16x128xf32>
    %131 = vector.broadcast %128 : vector<1x128xf32> to vector<16x128xf32>
    %132 = arith.addf %130, %131 : vector<16x128xf32>
    %cst_51 = arith.constant 0.000000e+00 : f32
    %133 = vector.broadcast %cst_51 : f32 to vector<16x128xf32>
    %134 = arith.maximumf %132, %133 : vector<16x128xf32>
    %c0_52 = arith.constant 0 : index
    %c0_53 = arith.constant 0 : index
    %c0_54 = arith.constant 0 : index
    %135 = vector.load %arg13[%c0_52, %c0_53, %c0_54] : memref<1x128x32xbf16, #tpu.memory_space<vmem>>, vector<1x128x32xbf16>
    %136 = vector.shape_cast %135 : vector<1x128x32xbf16> to vector<128x32xbf16>
    %c0_55 = arith.constant 0 : index
    %c0_56 = arith.constant 0 : index
    %c0_57 = arith.constant 0 : index
    %137 = vector.load %arg14[%c0_55, %c0_56, %c0_57] : memref<1x1x32xf32, #tpu.memory_space<vmem>>, vector<1x1x32xf32>
    %138 = vector.shape_cast %137 : vector<1x1x32xf32> to vector<1x32xf32>
    %139 = arith.truncf %134 : vector<16x128xf32> to vector<16x128xbf16>
    %cst_58 = arith.constant dense<0.000000e+00> : vector<16x32xf32>
    %140 = tpu.matmul %139, %136, %cst_58 {dimension_numbers = #tpu.dot_dimension_numbers<[1], [0], [0], [1], [0, 0, 1, 1], [], []>} : vector<16x128xbf16>, vector<128x32xbf16>, vector<16x32xf32> -> vector<16x32xf32>
    %141 = vector.broadcast %138 : vector<1x32xf32> to vector<16x32xf32>
    %142 = arith.addf %140, %141 : vector<16x32xf32>
    %143 = arith.addf %124, %142 : vector<16x32xf32>
    %c0_59 = arith.constant 0 : index
    %c0_60 = arith.constant 0 : index
    %c0_61 = arith.constant 0 : index
    %144 = vector.load %arg15[%c0_59, %c0_60, %c0_61] : memref<1x1x32xf32, #tpu.memory_space<vmem>>, vector<1x1x32xf32>
    %145 = vector.shape_cast %144 : vector<1x1x32xf32> to vector<1x32xf32>
    %c0_62 = arith.constant 0 : index
    %c0_63 = arith.constant 0 : index
    %c0_64 = arith.constant 0 : index
    %146 = vector.load %arg16[%c0_62, %c0_63, %c0_64] : memref<1x1x32xf32, #tpu.memory_space<vmem>>, vector<1x1x32xf32>
    %147 = vector.shape_cast %146 : vector<1x1x32xf32> to vector<1x32xf32>
    %cst_65 = arith.constant dense<0.000000e+00> : vector<16xf32>
    %148 = vector.multi_reduction <add>, %143, %cst_65 [1] : vector<16x32xf32> to vector<16xf32>
    %149 = vector.shape_cast %148 : vector<16xf32> to vector<16x1xf32>
    %cst_66 = arith.constant 3.200000e+01 : f32
    %150 = vector.broadcast %cst_66 : f32 to vector<16x1xf32>
    %151 = arith.divf %149, %150 : vector<16x1xf32>
    %152 = vector.broadcast %151 : vector<16x1xf32> to vector<16x32xf32>
    %153 = arith.subf %143, %152 : vector<16x32xf32>
    %154 = arith.mulf %153, %153 : vector<16x32xf32>
    %cst_67 = arith.constant dense<0.000000e+00> : vector<16xf32>
    %155 = vector.multi_reduction <add>, %154, %cst_67 [1] : vector<16x32xf32> to vector<16xf32>
    %156 = vector.shape_cast %155 : vector<16xf32> to vector<16x1xf32>
    %cst_68 = arith.constant 3.200000e+01 : f32
    %157 = vector.broadcast %cst_68 : f32 to vector<16x1xf32>
    %158 = arith.divf %156, %157 : vector<16x1xf32>
    %cst_69 = arith.constant 9.99999974E-6 : f32
    %159 = vector.broadcast %cst_69 : f32 to vector<16x1xf32>
    %160 = arith.addf %158, %159 : vector<16x1xf32>
    %161 = math.rsqrt %160 : vector<16x1xf32>
    %162 = vector.broadcast %161 : vector<16x1xf32> to vector<16x32xf32>
    %163 = arith.mulf %153, %162 : vector<16x32xf32>
    %164 = vector.broadcast %145 : vector<1x32xf32> to vector<16x32xf32>
    %165 = arith.mulf %163, %164 : vector<16x32xf32>
    %166 = vector.broadcast %147 : vector<1x32xf32> to vector<16x32xf32>
    %167 = arith.addf %165, %166 : vector<16x32xf32>
    %168 = vector.shape_cast %167 : vector<16x32xf32> to vector<2x8x32xf32>
    %c0_70 = arith.constant 0 : index
    %c0_71 = arith.constant 0 : index
    %c0_72 = arith.constant 0 : index
    %169 = vector.load %arg22[%c0_70, %c0_71, %c0_72] : memref<2x8x32xf32, #tpu.memory_space<vmem>>, vector<2x8x32xf32>
    tpu.vector_store %arg22[%c0_70, %c0_71, %c0_72], %168 {strides = array<i32>} : memref<2x8x32xf32, #tpu.memory_space<vmem>>, vector<2x8x32xf32>,
    %c1_i32 = arith.constant 1 : i32
    %170 = arith.cmpi eq, %arg0, %c1_i32 : i32
    %171 = arith.extui %170 : i1 to i32
    %c0_i32_73 = arith.constant 0 : i32
    %172 = arith.cmpi ne, %171, %c0_i32_73 : i32
    scf.if %172 {
      %cst_74 = arith.constant dense<0.000000e+00> : vector<2x32xf32>
      %173 = vector.multi_reduction <add>, %168, %cst_74 [1] : vector<2x8x32xf32> to vector<2x32xf32>
      %cst_75 = arith.constant 8.000000e+00 : f32
      %174 = vector.broadcast %cst_75 : f32 to vector<2x32xf32>
      %175 = arith.divf %173, %174 : vector<2x32xf32>
      %c0_76 = arith.constant 0 : index
      %c0_77 = arith.constant 0 : index
      %176 = vector.load %arg17[%c0_76, %c0_77] : memref<1x32xf32, #tpu.memory_space<vmem>>, vector<1x32xf32>
      %c0_78 = arith.constant 0 : index
      %c0_79 = arith.constant 0 : index
      %177 = vector.load %arg18[%c0_78, %c0_79] : memref<1x32xf32, #tpu.memory_space<vmem>>, vector<1x32xf32>
      %cst_80 = arith.constant dense<0.000000e+00> : vector<2xf32>
      %178 = vector.multi_reduction <add>, %175, %cst_80 [1] : vector<2x32xf32> to vector<2xf32>
      %179 = vector.shape_cast %178 : vector<2xf32> to vector<2x1xf32>
      %cst_81 = arith.constant 3.200000e+01 : f32
      %180 = vector.broadcast %cst_81 : f32 to vector<2x1xf32>
      %181 = arith.divf %179, %180 : vector<2x1xf32>
      %182 = vector.broadcast %181 : vector<2x1xf32> to vector<2x32xf32>
      %183 = arith.subf %175, %182 : vector<2x32xf32>
      %184 = arith.mulf %183, %183 : vector<2x32xf32>
      %cst_82 = arith.constant dense<0.000000e+00> : vector<2xf32>
      %185 = vector.multi_reduction <add>, %184, %cst_82 [1] : vector<2x32xf32> to vector<2xf32>
      %186 = vector.shape_cast %185 : vector<2xf32> to vector<2x1xf32>
      %cst_83 = arith.constant 3.200000e+01 : f32
      %187 = vector.broadcast %cst_83 : f32 to vector<2x1xf32>
      %188 = arith.divf %186, %187 : vector<2x1xf32>
      %cst_84 = arith.constant 9.99999974E-6 : f32
      %189 = vector.broadcast %cst_84 : f32 to vector<2x1xf32>
      %190 = arith.addf %188, %189 : vector<2x1xf32>
      %191 = math.rsqrt %190 : vector<2x1xf32>
      %192 = vector.broadcast %191 : vector<2x1xf32> to vector<2x32xf32>
      %193 = arith.mulf %183, %192 : vector<2x32xf32>
      %194 = vector.broadcast %176 : vector<1x32xf32> to vector<2x32xf32>
      %195 = arith.mulf %193, %194 : vector<2x32xf32>
      %196 = vector.broadcast %177 : vector<1x32xf32> to vector<2x32xf32>
      %197 = arith.addf %195, %196 : vector<2x32xf32>
      %c0_85 = arith.constant 0 : index
      %c0_86 = arith.constant 0 : index
      %198 = vector.load %arg19[%c0_85, %c0_86] : memref<32x5xbf16, #tpu.memory_space<vmem>>, vector<32x5xbf16>
      %c0_87 = arith.constant 0 : index
      %c0_88 = arith.constant 0 : index
      %199 = vector.load %arg20[%c0_87, %c0_88] : memref<1x5xf32, #tpu.memory_space<vmem>>, vector<1x5xf32>
      %200 = arith.truncf %197 : vector<2x32xf32> to vector<2x32xbf16>
      %cst_89 = arith.constant dense<0.000000e+00> : vector<2x5xf32>
      %201 = tpu.matmul %200, %198, %cst_89 {dimension_numbers = #tpu.dot_dimension_numbers<[1], [0], [0], [1], [0, 0, 1, 1], [], []>} : vector<2x32xbf16>, vector<32x5xbf16>, vector<2x5xf32> -> vector<2x5xf32>
      %202 = vector.broadcast %199 : vector<1x5xf32> to vector<2x5xf32>
      %203 = arith.addf %201, %202 : vector<2x5xf32>
      %c0_90 = arith.constant 0 : index
      %c0_91 = arith.constant 0 : index
      %204 = vector.load %arg21[%c0_90, %c0_91] : memref<2x5xf32, #tpu.memory_space<vmem>>, vector<2x5xf32>
      tpu.vector_store %arg21[%c0_90, %c0_91], %203 {strides = array<i32>} : memref<2x5xf32, #tpu.memory_space<vmem>>, vector<2x5xf32>,
    } else {
    }
    return
  }
  func.func @transform_0(%arg0: i32) -> (i32, i32, i32) {
    %c0_i32 = arith.constant 0 : i32
    %c0_i32_0 = arith.constant 0 : i32
    %c0_i32_1 = arith.constant 0 : i32
    %c0_i32_2 = arith.constant 0 : i32
    return %c0_i32, %c0_i32_0, %c0_i32_1 : i32, i32, i32
  }
  func.func @transform_1(%arg0: i32) -> (i32, i32) {
    %c0_i32 = arith.constant 0 : i32
    %c0_i32_0 = arith.constant 0 : i32
    %c0_i32_1 = arith.constant 0 : i32
    return %c0_i32, %c0_i32_0 : i32, i32
  }
  func.func @transform_2(%arg0: i32) -> (i32, i32) {
    %c0_i32 = arith.constant 0 : i32
    %c0_i32_0 = arith.constant 0 : i32
    %c0_i32_1 = arith.constant 0 : i32
    return %c0_i32, %c0_i32_0 : i32, i32
  }
  func.func @transform_3(%arg0: i32) -> (i32, i32) {
    %c0_i32 = arith.constant 0 : i32
    %c0_i32_0 = arith.constant 0 : i32
    %c0_i32_1 = arith.constant 0 : i32
    return %c0_i32, %c0_i32_0 : i32, i32
  }
  func.func @transform_4(%arg0: i32) -> (i32, i32, i32) {
    %c0_i32 = arith.constant 0 : i32
    %c0_i32_0 = arith.constant 0 : i32
    %c0_i32_1 = arith.constant 0 : i32
    return %arg0, %c0_i32, %c0_i32_0 : i32, i32, i32
  }
  func.func @transform_5(%arg0: i32) -> (i32, i32, i32) {
    %c0_i32 = arith.constant 0 : i32
    %c0_i32_0 = arith.constant 0 : i32
    %c0_i32_1 = arith.constant 0 : i32
    return %arg0, %c0_i32, %c0_i32_0 : i32, i32, i32
  }
  func.func @transform_6(%arg0: i32) -> (i32, i32, i32) {
    %c0_i32 = arith.constant 0 : i32
    %c0_i32_0 = arith.constant 0 : i32
    %c0_i32_1 = arith.constant 0 : i32
    return %arg0, %c0_i32, %c0_i32_0 : i32, i32, i32
  }
  func.func @transform_7(%arg0: i32) -> (i32, i32, i32) {
    %c0_i32 = arith.constant 0 : i32
    %c0_i32_0 = arith.constant 0 : i32
    %c0_i32_1 = arith.constant 0 : i32
    return %arg0, %c0_i32, %c0_i32_0 : i32, i32, i32
  }
  func.func @transform_8(%arg0: i32) -> (i32, i32, i32) {
    %c0_i32 = arith.constant 0 : i32
    %c0_i32_0 = arith.constant 0 : i32
    %c0_i32_1 = arith.constant 0 : i32
    return %arg0, %c0_i32, %c0_i32_0 : i32, i32, i32
  }
  func.func @transform_9(%arg0: i32) -> (i32, i32, i32) {
    %c0_i32 = arith.constant 0 : i32
    %c0_i32_0 = arith.constant 0 : i32
    %c0_i32_1 = arith.constant 0 : i32
    return %arg0, %c0_i32, %c0_i32_0 : i32, i32, i32
  }
  func.func @transform_10(%arg0: i32) -> (i32, i32, i32) {
    %c0_i32 = arith.constant 0 : i32
    %c0_i32_0 = arith.constant 0 : i32
    %c0_i32_1 = arith.constant 0 : i32
    return %arg0, %c0_i32, %c0_i32_0 : i32, i32, i32
  }
  func.func @transform_11(%arg0: i32) -> (i32, i32, i32) {
    %c0_i32 = arith.constant 0 : i32
    %c0_i32_0 = arith.constant 0 : i32
    %c0_i32_1 = arith.constant 0 : i32
    return %arg0, %c0_i32, %c0_i32_0 : i32, i32, i32
  }
  func.func @transform_12(%arg0: i32) -> (i32, i32, i32) {
    %c0_i32 = arith.constant 0 : i32
    %c0_i32_0 = arith.constant 0 : i32
    %c0_i32_1 = arith.constant 0 : i32
    return %arg0, %c0_i32, %c0_i32_0 : i32, i32, i32
  }
  func.func @transform_13(%arg0: i32) -> (i32, i32, i32) {
    %c0_i32 = arith.constant 0 : i32
    %c0_i32_0 = arith.constant 0 : i32
    %c0_i32_1 = arith.constant 0 : i32
    return %arg0, %c0_i32, %c0_i32_0 : i32, i32, i32
  }
  func.func @transform_14(%arg0: i32) -> (i32, i32, i32) {
    %c0_i32 = arith.constant 0 : i32
    %c0_i32_0 = arith.constant 0 : i32
    %c0_i32_1 = arith.constant 0 : i32
    return %arg0, %c0_i32, %c0_i32_0 : i32, i32, i32
  }
  func.func @transform_15(%arg0: i32) -> (i32, i32, i32) {
    %c0_i32 = arith.constant 0 : i32
    %c0_i32_0 = arith.constant 0 : i32
    %c0_i32_1 = arith.constant 0 : i32
    return %arg0, %c0_i32, %c0_i32_0 : i32, i32, i32
  }
  func.func @transform_16(%arg0: i32) -> (i32, i32) {
    %c0_i32 = arith.constant 0 : i32
    %c0_i32_0 = arith.constant 0 : i32
    %c0_i32_1 = arith.constant 0 : i32
    return %c0_i32, %c0_i32_0 : i32, i32
  }
  func.func @transform_17(%arg0: i32) -> (i32, i32) {
    %c0_i32 = arith.constant 0 : i32
    %c0_i32_0 = arith.constant 0 : i32
    %c0_i32_1 = arith.constant 0 : i32
    return %c0_i32, %c0_i32_0 : i32, i32
  }
  func.func @transform_18(%arg0: i32) -> (i32, i32) {
    %c0_i32 = arith.constant 0 : i32
    %c0_i32_0 = arith.constant 0 : i32
    %c0_i32_1 = arith.constant 0 : i32
    return %c0_i32, %c0_i32_0 : i32, i32
  }
  func.func @transform_19(%arg0: i32) -> (i32, i32) {
    %c0_i32 = arith.constant 0 : i32
    %c0_i32_0 = arith.constant 0 : i32
    %c0_i32_1 = arith.constant 0 : i32
    return %c0_i32, %c0_i32_0 : i32, i32
  }
  func.func @transform_20(%arg0: i32) -> (i32, i32) {
    %c0_i32 = arith.constant 0 : i32
    %c0_i32_0 = arith.constant 0 : i32
    %c0_i32_1 = arith.constant 0 : i32
    return %c0_i32, %c0_i32_0 : i32, i32
  }
}

</mosaic_0001>

<llo_original>
// kernel: transformer_classifier.1
$region0: #{transformer_classifier.1}
  #allocation0 [shape = 'u32[]', space=smem, size = 0x4, offset = 0x4, fixed_abs, tag = 'smem constant byte address 0x4 - core index']
  #allocation1 [shape = 'u32[144,128]{1,0:T(1,128)}', space=vmem, size = 0x12000, scoped, tag = 'internal scratch']
  #allocation2 [shape = 'f32[2,8,32]{2,1,0:T(8,128)}', space=vmem, size = 0x2000, scoped, tag = 'scratch operand']
  %s0 = inlined_call_operand.vmem [shape: f32[2,8,16], index: 0, kind: input, shape index: {}]
  %s1 = inlined_call_operand.vmem [shape: f32[8,32], index: 1, kind: input, shape index: {}]
  %s2 = inlined_call_operand.vmem [shape: bf16[16,32], index: 2, kind: input, shape index: {}]
  %s3 = inlined_call_operand.vmem [shape: f32[1,32], index: 3, kind: input, shape index: {}]
  %s4 = inlined_call_operand.vmem [shape: bf16[2,32,96], index: 4, kind: input, shape index: {}]
  %s5 = inlined_call_operand.vmem [shape: f32[2,1,96], index: 5, kind: input, shape index: {}]
  %s6 = inlined_call_operand.vmem [shape: bf16[2,32,32], index: 6, kind: input, shape index: {}]
  %s7 = inlined_call_operand.vmem [shape: f32[2,1,32], index: 7, kind: input, shape index: {}]
  %s8 = inlined_call_operand.vmem [shape: f32[2,1,32], index: 8, kind: input, shape index: {}]
  %s9 = inlined_call_operand.vmem [shape: f32[2,1,32], index: 9, kind: input, shape index: {}]
  %s10 = inlined_call_operand.vmem [shape: bf16[2,32,128], index: 10, kind: input, shape index: {}]
  %s11 = inlined_call_operand.vmem [shape: f32[2,1,128], index: 11, kind: input, shape index: {}]
  %s12 = inlined_call_operand.vmem [shape: bf16[2,128,32], index: 12, kind: input, shape index: {}]
  %s13 = inlined_call_operand.vmem [shape: f32[2,1,32], index: 13, kind: input, shape index: {}]
  %s14 = inlined_call_operand.vmem [shape: f32[2,1,32], index: 14, kind: input, shape index: {}]
  %s15 = inlined_call_operand.vmem [shape: f32[2,1,32], index: 15, kind: input, shape index: {}]
  %s16 = inlined_call_operand.vmem [shape: f32[1,32], index: 16, kind: input, shape index: {}]
  %s17 = inlined_call_operand.vmem [shape: f32[1,32], index: 17, kind: input, shape index: {}]
  %s18 = inlined_call_operand.vmem [shape: bf16[32,5], index: 18, kind: input, shape index: {}]
  %s19 = inlined_call_operand.vmem [shape: f32[1,5], index: 19, kind: input, shape index: {}]
  %s20 = inlined_call_operand.hbm [shape: f32[2,5], index: 20, kind: output, shape index: {}]
  %s21 = sld [smem:[#allocation0]]
  $region121: #{transformer_classifier.1} parent=0
    _
  %s23 = ssub.s32 1, %s21
  %s24 = scalar_select 0, %s23, %s21
  $region1: #{transformer_classifier.1} parent=0
    #allocation3 [shape = 'u8[1024]{0}', space=vmem, size = 0x400, scoped, tag = 'output window, operand 0, single buffered']
    #allocation4 [shape = 's32[2]{0}', space=sflag, size = 0x8, scoped, tag = 'scoped memory for transformer_classifier.1']
    %25 = vsyncpa [#allocation4], 0
    loop: start=0, step=1, limit=4
    $region2: #{transformer_classifier.1} parent=1 // loop_pre_header
      _
    $region3: #{transformer_classifier.1} parent=1 // loop_header
      %s27 = sphi 0, %s31
      %p28 = scmp.ge.s32.totalorder %s27, 4
      %s35 = sphi 0, %s35
      %s37 = sphi 0, %s35
      %s38 = sphi 0, %s37
      %s52 = sphi 0, %s38
      %s56 = sphi 0, %s56
      %s58 = sphi 0, %s56
      %s59 = sphi 0, %s58
      %s73 = sphi 0, %s59
      %s77 = sphi 0, %s77
      %s79 = sphi 0, %s77
      %s80 = sphi 0, %s79
      %s94 = sphi 0, %s80
      %s98 = sphi 0, %s98
      %s100 = sphi 0, %s98
      %s101 = sphi 0, %s100
      %s115 = sphi 0, %s101
      %s121 = sphi 0, %s123
      %s124 = sphi 0, %s121
      %s125 = sphi 0, %s124
      %s141 = sphi 0, %s125
      %s147 = sphi 0, %s149
      %s150 = sphi 0, %s147
      %s151 = sphi 0, %s150
      %s167 = sphi 0, %s151
      %s173 = sphi 0, %s175
      %s176 = sphi 0, %s173
      %s177 = sphi 0, %s176
      %s193 = sphi 0, %s177
      %s199 = sphi 0, %s201
      %s202 = sphi 0, %s199
      %s203 = sphi 0, %s202
      %s219 = sphi 0, %s203
      %s225 = sphi 0, %s227
      %s228 = sphi 0, %s225
      %s229 = sphi 0, %s228
      %s245 = sphi 0, %s229
      %s251 = sphi 0, %s253
      %s254 = sphi 0, %s251
      %s255 = sphi 0, %s254
      %s271 = sphi 0, %s255
      %s277 = sphi 0, %s279
      %s280 = sphi 0, %s277
      %s281 = sphi 0, %s280
      %s297 = sphi 0, %s281
      %s303 = sphi 0, %s305
      %s306 = sphi 0, %s303
      %s307 = sphi 0, %s306
      %s323 = sphi 0, %s307
      %s329 = sphi 0, %s331
      %s332 = sphi 0, %s329
      %s333 = sphi 0, %s332
      %s349 = sphi 0, %s333
      %s355 = sphi 0, %s357
      %s358 = sphi 0, %s355
      %s359 = sphi 0, %s358
      %s375 = sphi 0, %s359
      %s381 = sphi 0, %s383
      %s384 = sphi 0, %s381
      %s385 = sphi 0, %s384
      %s401 = sphi 0, %s385
      %s407 = sphi 0, %s409
      %s410 = sphi 0, %s407
      %s411 = sphi 0, %s410
      %s427 = sphi 0, %s411
      %s431 = sphi 0, %s431
      %s433 = sphi 0, %s431
      %s434 = sphi 0, %s433
      %s448 = sphi 0, %s434
      %s452 = sphi 0, %s452
      %s454 = sphi 0, %s452
      %s455 = sphi 0, %s454
      %s469 = sphi 0, %s455
      %s473 = sphi 0, %s473
      %s475 = sphi 0, %s473
      %s476 = sphi 0, %s475
      %s490 = sphi 0, %s476
      %s494 = sphi 0, %s494
      %s496 = sphi 0, %s494
      %s497 = sphi 0, %s496
      %s511 = sphi 0, %s497
      %s515 = sphi 0, %s515
      %s517 = sphi 0, %s515
      %s518 = sphi 0, %s517
      %s532 = sphi 0, %s518
    $region4: #{transformer_classifier.1} parent=1 // loop_header_branch
      %30 = sbr.rel (%p28) target = $region8
    $region5: #{transformer_classifier.1} parent=1 // loop_body
      %s32 = ssub.s32 %s27, 1
      %s33 = ssub.s32 %s27, 2
      %s34 = sadd.s32 %s27, 1
      %s36 = sadd.s32 %s35, 1
      %p39 = scmp.eq.s32.totalorder %s27, 1
      %p40 = scmp.ne.s32.totalorder %s35, %s37
      %p41 = scmp.eq.s32.totalorder %s27, 0
      %p42 = por %p40, %p41
      %p43 = scmp.ne.s32.totalorder %s35, %s37
      %p44 = scmp.eq.s32.totalorder %s32, 1
      %p45 = por %p43, %p44
      %p46 = scmp.ne.s32.totalorder %s37, %s38
      %p47 = scmp.eq.s32.totalorder %s32, 0
      %p48 = por %p46, %p47
      %p49 = scmp.ne.s32.totalorder %s37, %s38
      %p50 = scmp.eq.s32.totalorder %s33, 1
      %p51 = por %p49, %p50
      %p53 = scmp.ne.s32.totalorder %s38, %s52
      %p54 = scmp.eq.s32.totalorder %s33, 0
      %p55 = por %p53, %p54
      %s57 = sadd.s32 %s56, 1
      %p60 = scmp.eq.s32.totalorder %s27, 1
      %p61 = scmp.ne.s32.totalorder %s56, %s58
      %p62 = scmp.eq.s32.totalorder %s27, 0
      %p63 = por %p61, %p62
      %p64 = scmp.ne.s32.totalorder %s56, %s58
      %p65 = scmp.eq.s32.totalorder %s32, 1
      %p66 = por %p64, %p65
      %p67 = scmp.ne.s32.totalorder %s58, %s59
      %p68 = scmp.eq.s32.totalorder %s32, 0
      %p69 = por %p67, %p68
      %p70 = scmp.ne.s32.totalorder %s58, %s59
      %p71 = scmp.eq.s32.totalorder %s33, 1
      %p72 = por %p70, %p71
      %p74 = scmp.ne.s32.totalorder %s59, %s73
      %p75 = scmp.eq.s32.totalorder %s33, 0
      %p76 = por %p74, %p75
      %s78 = sadd.s32 %s77, 1
      %p81 = scmp.eq.s32.totalorder %s27, 1
      %p82 = scmp.ne.s32.totalorder %s77, %s79
      %p83 = scmp.eq.s32.totalorder %s27, 0
      %p84 = por %p82, %p83
      %p85 = scmp.ne.s32.totalorder %s77, %s79
      %p86 = scmp.eq.s32.totalorder %s32, 1
      %p87 = por %p85, %p86
      %p88 = scmp.ne.s32.totalorder %s79, %s80
      %p89 = scmp.eq.s32.totalorder %s32, 0
      %p90 = por %p88, %p89
      %p91 = scmp.ne.s32.totalorder %s79, %s80
      %p92 = scmp.eq.s32.totalorder %s33, 1
      %p93 = por %p91, %p92
      %p95 = scmp.ne.s32.totalorder %s80, %s94
      %p96 = scmp.eq.s32.totalorder %s33, 0
      %p97 = por %p95, %p96
      %s99 = sadd.s32 %s98, 1
      %p102 = scmp.eq.s32.totalorder %s27, 1
      %p103 = scmp.ne.s32.totalorder %s98, %s100
      %p104 = scmp.eq.s32.totalorder %s27, 0
      %p105 = por %p103, %p104
      %p106 = scmp.ne.s32.totalorder %s98, %s100
      %p107 = scmp.eq.s32.totalorder %s32, 1
      %p108 = por %p106, %p107
      %p109 = scmp.ne.s32.totalorder %s100, %s101
      %p110 = scmp.eq.s32.totalorder %s32, 0
      %p111 = por %p109, %p110
      %p112 = scmp.ne.s32.totalorder %s100, %s101
      %p113 = scmp.eq.s32.totalorder %s33, 1
      %p114 = por %p112, %p113
      %p116 = scmp.ne.s32.totalorder %s101, %s115
      %p117 = scmp.eq.s32.totalorder %s33, 0
      %p118 = por %p116, %p117
      %s119 = ssub.s32 %s27, %s34
      %p120 = scmp.eq.s32.totalorder %s119, 0
      %s122 = sadd.s32 %s121, 1
      %s123 = scalar_select %p120, %s121, %s122
      %p126 = pneg %p120
      %p127 = scmp.eq.s32.totalorder %s27, 1
      %p128 = por %p126, %p127
      %p129 = scmp.ne.s32.totalorder %s121, %s124
      %p130 = scmp.eq.s32.totalorder %s27, 0
      %p131 = por %p129, %p130
      %p132 = scmp.ne.s32.totalorder %s121, %s124
      %p133 = scmp.eq.s32.totalorder %s32, 1
      %p134 = por %p132, %p133
      %p135 = scmp.ne.s32.totalorder %s124, %s125
      %p136 = scmp.eq.s32.totalorder %s32, 0
      %p137 = por %p135, %p136
      %p138 = scmp.ne.s32.totalorder %s124, %s125
      %p139 = scmp.eq.s32.totalorder %s33, 1
      %p140 = por %p138, %p139
      %p142 = scmp.ne.s32.totalorder %s125, %s141
      %p143 = scmp.eq.s32.totalorder %s33, 0
      %p144 = por %p142, %p143
      %s145 = ssub.s32 %s27, %s34
      %p146 = scmp.eq.s32.totalorder %s145, 0
      %s148 = sadd.s32 %s147, 1
      %s149 = scalar_select %p146, %s147, %s148
      %p152 = pneg %p146
      %p153 = scmp.eq.s32.totalorder %s27, 1
      %p154 = por %p152, %p153
      %p155 = scmp.ne.s32.totalorder %s147, %s150
      %p156 = scmp.eq.s32.totalorder %s27, 0
      %p157 = por %p155, %p156
      %p158 = scmp.ne.s32.totalorder %s147, %s150
      %p159 = scmp.eq.s32.totalorder %s32, 1
      %p160 = por %p158, %p159
      %p161 = scmp.ne.s32.totalorder %s150, %s151
      %p162 = scmp.eq.s32.totalorder %s32, 0
      %p163 = por %p161, %p162
      %p164 = scmp.ne.s32.totalorder %s150, %s151
      %p165 = scmp.eq.s32.totalorder %s33, 1
      %p166 = por %p164, %p165
      %p168 = scmp.ne.s32.totalorder %s151, %s167
      %p169 = scmp.eq.s32.totalorder %s33, 0
      %p170 = por %p168, %p169
      %s171 = ssub.s32 %s27, %s34
      %p172 = scmp.eq.s32.totalorder %s171, 0
      %s174 = sadd.s32 %s173, 1
      %s175 = scalar_select %p172, %s173, %s174
      %p178 = pneg %p172
      %p179 = scmp.eq.s32.totalorder %s27, 1
      %p180 = por %p178, %p179
      %p181 = scmp.ne.s32.totalorder %s173, %s176
      %p182 = scmp.eq.s32.totalorder %s27, 0
      %p183 = por %p181, %p182
      %p184 = scmp.ne.s32.totalorder %s173, %s176
      %p185 = scmp.eq.s32.totalorder %s32, 1
      %p186 = por %p184, %p185
      %p187 = scmp.ne.s32.totalorder %s176, %s177
      %p188 = scmp.eq.s32.totalorder %s32, 0
      %p189 = por %p187, %p188
      %p190 = scmp.ne.s32.totalorder %s176, %s177
      %p191 = scmp.eq.s32.totalorder %s33, 1
      %p192 = por %p190, %p191
      %p194 = scmp.ne.s32.totalorder %s177, %s193
      %p195 = scmp.eq.s32.totalorder %s33, 0
      %p196 = por %p194, %p195
      %s197 = ssub.s32 %s27, %s34
      %p198 = scmp.eq.s32.totalorder %s197, 0
      %s200 = sadd.s32 %s199, 1
      %s201 = scalar_select %p198, %s199, %s200
      %p204 = pneg %p198
      %p205 = scmp.eq.s32.totalorder %s27, 1
      %p206 = por %p204, %p205
      %p207 = scmp.ne.s32.totalorder %s199, %s202
      %p208 = scmp.eq.s32.totalorder %s27, 0
      %p209 = por %p207, %p208
      %p210 = scmp.ne.s32.totalorder %s199, %s202
      %p211 = scmp.eq.s32.totalorder %s32, 1
      %p212 = por %p210, %p211
      %p213 = scmp.ne.s32.totalorder %s202, %s203
      %p214 = scmp.eq.s32.totalorder %s32, 0
      %p215 = por %p213, %p214
      %p216 = scmp.ne.s32.totalorder %s202, %s203
      %p217 = scmp.eq.s32.totalorder %s33, 1
      %p218 = por %p216, %p217
      %p220 = scmp.ne.s32.totalorder %s203, %s219
      %p221 = scmp.eq.s32.totalorder %s33, 0
      %p222 = por %p220, %p221
      %s223 = ssub.s32 %s27, %s34
      %p224 = scmp.eq.s32.totalorder %s223, 0
      %s226 = sadd.s32 %s225, 1
      %s227 = scalar_select %p224, %s225, %s226
      %p230 = pneg %p224
      %p231 = scmp.eq.s32.totalorder %s27, 1
      %p232 = por %p230, %p231
      %p233 = scmp.ne.s32.totalorder %s225, %s228
      %p234 = scmp.eq.s32.totalorder %s27, 0
      %p235 = por %p233, %p234
      %p236 = scmp.ne.s32.totalorder %s225, %s228
      %p237 = scmp.eq.s32.totalorder %s32, 1
      %p238 = por %p236, %p237
      %p239 = scmp.ne.s32.totalorder %s228, %s229
      %p240 = scmp.eq.s32.totalorder %s32, 0
      %p241 = por %p239, %p240
      %p242 = scmp.ne.s32.totalorder %s228, %s229
      %p243 = scmp.eq.s32.totalorder %s33, 1
      %p244 = por %p242, %p243
      %p246 = scmp.ne.s32.totalorder %s229, %s245
      %p247 = scmp.eq.s32.totalorder %s33, 0
      %p248 = por %p246, %p247
      %s249 = ssub.s32 %s27, %s34
      %p250 = scmp.eq.s32.totalorder %s249, 0
      %s252 = sadd.s32 %s251, 1
      %s253 = scalar_select %p250, %s251, %s252
      %p256 = pneg %p250
      %p257 = scmp.eq.s32.totalorder %s27, 1
      %p258 = por %p256, %p257
      %p259 = scmp.ne.s32.totalorder %s251, %s254
      %p260 = scmp.eq.s32.totalorder %s27, 0
      %p261 = por %p259, %p260
      %p262 = scmp.ne.s32.totalorder %s251, %s254
      %p263 = scmp.eq.s32.totalorder %s32, 1
      %p264 = por %p262, %p263
      %p265 = scmp.ne.s32.totalorder %s254, %s255
      %p266 = scmp.eq.s32.totalorder %s32, 0
      %p267 = por %p265, %p266
      %p268 = scmp.ne.s32.totalorder %s254, %s255
      %p269 = scmp.eq.s32.totalorder %s33, 1
      %p270 = por %p268, %p269
      %p272 = scmp.ne.s32.totalorder %s255, %s271
      %p273 = scmp.eq.s32.totalorder %s33, 0
      %p274 = por %p272, %p273
      %s275 = ssub.s32 %s27, %s34
      %p276 = scmp.eq.s32.totalorder %s275, 0
      %s278 = sadd.s32 %s277, 1
      %s279 = scalar_select %p276, %s277, %s278
      %p282 = pneg %p276
      %p283 = scmp.eq.s32.totalorder %s27, 1
      %p284 = por %p282, %p283
      %p285 = scmp.ne.s32.totalorder %s277, %s280
      %p286 = scmp.eq.s32.totalorder %s27, 0
      %p287 = por %p285, %p286
      %p288 = scmp.ne.s32.totalorder %s277, %s280
      %p289 = scmp.eq.s32.totalorder %s32, 1
      %p290 = por %p288, %p289
      %p291 = scmp.ne.s32.totalorder %s280, %s281
      %p292 = scmp.eq.s32.totalorder %s32, 0
      %p293 = por %p291, %p292
      %p294 = scmp.ne.s32.totalorder %s280, %s281
      %p295 = scmp.eq.s32.totalorder %s33, 1
      %p296 = por %p294, %p295
      %p298 = scmp.ne.s32.totalorder %s281, %s297
      %p299 = scmp.eq.s32.totalorder %s33, 0
      %p300 = por %p298, %p299
      %s301 = ssub.s32 %s27, %s34
      %p302 = scmp.eq.s32.totalorder %s301, 0
      %s304 = sadd.s32 %s303, 1
      %s305 = scalar_select %p302, %s303, %s304
      %p308 = pneg %p302
      %p309 = scmp.eq.s32.totalorder %s27, 1
      %p310 = por %p308, %p309
      %p311 = scmp.ne.s32.totalorder %s303, %s306
      %p312 = scmp.eq.s32.totalorder %s27, 0
      %p313 = por %p311, %p312
      %p314 = scmp.ne.s32.totalorder %s303, %s306
      %p315 = scmp.eq.s32.totalorder %s32, 1
      %p316 = por %p314, %p315
      %p317 = scmp.ne.s32.totalorder %s306, %s307
      %p318 = scmp.eq.s32.totalorder %s32, 0
      %p319 = por %p317, %p318
      %p320 = scmp.ne.s32.totalorder %s306, %s307
      %p321 = scmp.eq.s32.totalorder %s33, 1
      %p322 = por %p320, %p321
      %p324 = scmp.ne.s32.totalorder %s307, %s323
      %p325 = scmp.eq.s32.totalorder %s33, 0
      %p326 = por %p324, %p325
      %s327 = ssub.s32 %s27, %s34
      %p328 = scmp.eq.s32.totalorder %s327, 0
      %s330 = sadd.s32 %s329, 1
      %s331 = scalar_select %p328, %s329, %s330
      %p334 = pneg %p328
      %p335 = scmp.eq.s32.totalorder %s27, 1
      %p336 = por %p334, %p335
      %p337 = scmp.ne.s32.totalorder %s329, %s332
      %p338 = scmp.eq.s32.totalorder %s27, 0
      %p339 = por %p337, %p338
      %p340 = scmp.ne.s32.totalorder %s329, %s332
      %p341 = scmp.eq.s32.totalorder %s32, 1
      %p342 = por %p340, %p341
      %p343 = scmp.ne.s32.totalorder %s332, %s333
      %p344 = scmp.eq.s32.totalorder %s32, 0
      %p345 = por %p343, %p344
      %p346 = scmp.ne.s32.totalorder %s332, %s333
      %p347 = scmp.eq.s32.totalorder %s33, 1
      %p348 = por %p346, %p347
      %p350 = scmp.ne.s32.totalorder %s333, %s349
      %p351 = scmp.eq.s32.totalorder %s33, 0
      %p352 = por %p350, %p351
      %s353 = ssub.s32 %s27, %s34
      %p354 = scmp.eq.s32.totalorder %s353, 0
      %s356 = sadd.s32 %s355, 1
      %s357 = scalar_select %p354, %s355, %s356
      %p360 = pneg %p354
      %p361 = scmp.eq.s32.totalorder %s27, 1
      %p362 = por %p360, %p361
      %p363 = scmp.ne.s32.totalorder %s355, %s358
      %p364 = scmp.eq.s32.totalorder %s27, 0
      %p365 = por %p363, %p364
      %p366 = scmp.ne.s32.totalorder %s355, %s358
      %p367 = scmp.eq.s32.totalorder %s32, 1
      %p368 = por %p366, %p367
      %p369 = scmp.ne.s32.totalorder %s358, %s359
      %p370 = scmp.eq.s32.totalorder %s32, 0
      %p371 = por %p369, %p370
      %p372 = scmp.ne.s32.totalorder %s358, %s359
      %p373 = scmp.eq.s32.totalorder %s33, 1
      %p374 = por %p372, %p373
      %p376 = scmp.ne.s32.totalorder %s359, %s375
      %p377 = scmp.eq.s32.totalorder %s33, 0
      %p378 = por %p376, %p377
      %s379 = ssub.s32 %s27, %s34
      %p380 = scmp.eq.s32.totalorder %s379, 0
      %s382 = sadd.s32 %s381, 1
      %s383 = scalar_select %p380, %s381, %s382
      %p386 = pneg %p380
      %p387 = scmp.eq.s32.totalorder %s27, 1
      %p388 = por %p386, %p387
      %p389 = scmp.ne.s32.totalorder %s381, %s384
      %p390 = scmp.eq.s32.totalorder %s27, 0
      %p391 = por %p389, %p390
      %p392 = scmp.ne.s32.totalorder %s381, %s384
      %p393 = scmp.eq.s32.totalorder %s32, 1
      %p394 = por %p392, %p393
      %p395 = scmp.ne.s32.totalorder %s384, %s385
      %p396 = scmp.eq.s32.totalorder %s32, 0
      %p397 = por %p395, %p396
      %p398 = scmp.ne.s32.totalorder %s384, %s385
      %p399 = scmp.eq.s32.totalorder %s33, 1
      %p400 = por %p398, %p399
      %p402 = scmp.ne.s32.totalorder %s385, %s401
      %p403 = scmp.eq.s32.totalorder %s33, 0
      %p404 = por %p402, %p403
      %s405 = ssub.s32 %s27, %s34
      %p406 = scmp.eq.s32.totalorder %s405, 0
      %s408 = sadd.s32 %s407, 1
      %s409 = scalar_select %p406, %s407, %s408
      %p412 = pneg %p406
      %p413 = scmp.eq.s32.totalorder %s27, 1
      %p414 = por %p412, %p413
      %p415 = scmp.ne.s32.totalorder %s407, %s410
      %p416 = scmp.eq.s32.totalorder %s27, 0
      %p417 = por %p415, %p416
      %p418 = scmp.ne.s32.totalorder %s407, %s410
      %p419 = scmp.eq.s32.totalorder %s32, 1
      %p420 = por %p418, %p419
      %p421 = scmp.ne.s32.totalorder %s410, %s411
      %p422 = scmp.eq.s32.totalorder %s32, 0
      %p423 = por %p421, %p422
      %p424 = scmp.ne.s32.totalorder %s410, %s411
      %p425 = scmp.eq.s32.totalorder %s33, 1
      %p426 = por %p424, %p425
      %p428 = scmp.ne.s32.totalorder %s411, %s427
      %p429 = scmp.eq.s32.totalorder %s33, 0
      %p430 = por %p428, %p429
      %s432 = sadd.s32 %s431, 1
      %p435 = scmp.eq.s32.totalorder %s27, 1
      %p436 = scmp.ne.s32.totalorder %s431, %s433
      %p437 = scmp.eq.s32.totalorder %s27, 0
      %p438 = por %p436, %p437
      %p439 = scmp.ne.s32.totalorder %s431, %s433
      %p440 = scmp.eq.s32.totalorder %s32, 1
      %p441 = por %p439, %p440
      %p442 = scmp.ne.s32.totalorder %s433, %s434
      %p443 = scmp.eq.s32.totalorder %s32, 0
      %p444 = por %p442, %p443
      %p445 = scmp.ne.s32.totalorder %s433, %s434
      %p446 = scmp.eq.s32.totalorder %s33, 1
      %p447 = por %p445, %p446
      %p449 = scmp.ne.s32.totalorder %s434, %s448
      %p450 = scmp.eq.s32.totalorder %s33, 0
      %p451 = por %p449, %p450
      %s453 = sadd.s32 %s452, 1
      %p456 = scmp.eq.s32.totalorder %s27, 1
      %p457 = scmp.ne.s32.totalorder %s452, %s454
      %p458 = scmp.eq.s32.totalorder %s27, 0
      %p459 = por %p457, %p458
      %p460 = scmp.ne.s32.totalorder %s452, %s454
      %p461 = scmp.eq.s32.totalorder %s32, 1
      %p462 = por %p460, %p461
      %p463 = scmp.ne.s32.totalorder %s454, %s455
      %p464 = scmp.eq.s32.totalorder %s32, 0
      %p465 = por %p463, %p464
      %p466 = scmp.ne.s32.totalorder %s454, %s455
      %p467 = scmp.eq.s32.totalorder %s33, 1
      %p468 = por %p466, %p467
      %p470 = scmp.ne.s32.totalorder %s455, %s469
      %p471 = scmp.eq.s32.totalorder %s33, 0
      %p472 = por %p470, %p471
      %s474 = sadd.s32 %s473, 1
      %p477 = scmp.eq.s32.totalorder %s27, 1
      %p478 = scmp.ne.s32.totalorder %s473, %s475
      %p479 = scmp.eq.s32.totalorder %s27, 0
      %p480 = por %p478, %p479
      %p481 = scmp.ne.s32.totalorder %s473, %s475
      %p482 = scmp.eq.s32.totalorder %s32, 1
      %p483 = por %p481, %p482
      %p484 = scmp.ne.s32.totalorder %s475, %s476
      %p485 = scmp.eq.s32.totalorder %s32, 0
      %p486 = por %p484, %p485
      %p487 = scmp.ne.s32.totalorder %s475, %s476
      %p488 = scmp.eq.s32.totalorder %s33, 1
      %p489 = por %p487, %p488
      %p491 = scmp.ne.s32.totalorder %s476, %s490
      %p492 = scmp.eq.s32.totalorder %s33, 0
      %p493 = por %p491, %p492
      %s495 = sadd.s32 %s494, 1
      %p498 = scmp.eq.s32.totalorder %s27, 1
      %p499 = scmp.ne.s32.totalorder %s494, %s496
      %p500 = scmp.eq.s32.totalorder %s27, 0
      %p501 = por %p499, %p500
      %p502 = scmp.ne.s32.totalorder %s494, %s496
      %p503 = scmp.eq.s32.totalorder %s32, 1
      %p504 = por %p502, %p503
      %p505 = scmp.ne.s32.totalorder %s496, %s497
      %p506 = scmp.eq.s32.totalorder %s32, 0
      %p507 = por %p505, %p506
      %p508 = scmp.ne.s32.totalorder %s496, %s497
      %p509 = scmp.eq.s32.totalorder %s33, 1
      %p510 = por %p508, %p509
      %p512 = scmp.ne.s32.totalorder %s497, %s511
      %p513 = scmp.eq.s32.totalorder %s33, 0
      %p514 = por %p512, %p513
      %s516 = sadd.s32 %s515, 1
      %p519 = scmp.eq.s32.totalorder %s27, 1
      %p520 = scmp.ne.s32.totalorder %s515, %s517
      %p521 = scmp.eq.s32.totalorder %s27, 0
      %p522 = por %p520, %p521
      %p523 = scmp.ne.s32.totalorder %s515, %s517
      %p524 = scmp.eq.s32.totalorder %s32, 1
      %p525 = por %p523, %p524
      %p526 = scmp.ne.s32.totalorder %s517, %s518
      %p527 = scmp.eq.s32.totalorder %s32, 0
      %p528 = por %p526, %p527
      %p529 = scmp.ne.s32.totalorder %s517, %s518
      %p530 = scmp.eq.s32.totalorder %s33, 1
      %p531 = por %p529, %p530
      %p533 = scmp.ne.s32.totalorder %s518, %s532
      %p534 = scmp.eq.s32.totalorder %s33, 0
      %p535 = por %p533, %p534
      %p536 = scmp.le.s32.totalorder 1, %s27
      %p537 = scmp.lt.s32.totalorder %s27, 3
      %p538 = pnand %p536, %p537
      %p539 = pneg %p538
      // Predicated region
      $region9: #{transformer_classifier.1} parent=5 // pred_check
        _
      $region10: #{transformer_classifier.1} parent=5 // pred_check_branch
        %541 = sbr.rel (%p538) target = $region12
      $region11: #{transformer_classifier.1} parent=5 // pred_region
        %s542 = ssub.s32 %s27, 1
        // Predicated region
        $region13: #{transformer_classifier.1} parent=11 // pred_check
          %p543 = pneg %p48
        $region14: #{transformer_classifier.1} parent=11 // pred_check_branch
          %545 = sbr.rel (%p543) target = $region16
        $region15: #{transformer_classifier.1} parent=11 // pred_region
          _
        $region16: #{transformer_classifier.1} parent=11 // pred_fallthru
          _
        // Predicated region
        $region17: #{transformer_classifier.1} parent=11 // pred_check
          %p546 = pneg %p69
        $region18: #{transformer_classifier.1} parent=11 // pred_check_branch
          %548 = sbr.rel (%p546) target = $region20
        $region19: #{transformer_classifier.1} parent=11 // pred_region
          _
        $region20: #{transformer_classifier.1} parent=11 // pred_fallthru
          _
        // Predicated region
        $region21: #{transformer_classifier.1} parent=11 // pred_check
          %p549 = pneg %p90
        $region22: #{transformer_classifier.1} parent=11 // pred_check_branch
          %551 = sbr.rel (%p549) target = $region24
        $region23: #{transformer_classifier.1} parent=11 // pred_region
          _
        $region24: #{transformer_classifier.1} parent=11 // pred_fallthru
          _
        // Predicated region
        $region25: #{transformer_classifier.1} parent=11 // pred_check
          %p552 = pneg %p111
        $region26: #{transformer_classifier.1} parent=11 // pred_check_branch
          %554 = sbr.rel (%p552) target = $region28
        $region27: #{transformer_classifier.1} parent=11 // pred_region
          _
        $region28: #{transformer_classifier.1} parent=11 // pred_fallthru
          _
        // Predicated region
        $region29: #{transformer_classifier.1} parent=11 // pred_check
          %p555 = pneg %p444
        $region30: #{transformer_classifier.1} parent=11 // pred_check_branch
          %557 = sbr.rel (%p555) target = $region32
        $region31: #{transformer_classifier.1} parent=11 // pred_region
          _
        $region32: #{transformer_classifier.1} parent=11 // pred_fallthru
          _
        // Predicated region
        $region33: #{transformer_classifier.1} parent=11 // pred_check
          %p558 = pneg %p465
        $region34: #{transformer_classifier.1} parent=11 // pred_check_branch
          %560 = sbr.rel (%p558) target = $region36
        $region35: #{transformer_classifier.1} parent=11 // pred_region
          _
        $region36: #{transformer_classifier.1} parent=11 // pred_fallthru
          _
        // Predicated region
        $region37: #{transformer_classifier.1} parent=11 // pred_check
          %p561 = pneg %p486
        $region38: #{transformer_classifier.1} parent=11 // pred_check_branch
          %563 = sbr.rel (%p561) target = $region40
        $region39: #{transformer_classifier.1} parent=11 // pred_region
          _
        $region40: #{transformer_classifier.1} parent=11 // pred_fallthru
          _
        // Predicated region
        $region41: #{transformer_classifier.1} parent=11 // pred_check
          %p564 = pneg %p507
        $region42: #{transformer_classifier.1} parent=11 // pred_check_branch
          %566 = sbr.rel (%p564) target = $region44
        $region43: #{transformer_classifier.1} parent=11 // pred_region
          _
        $region44: #{transformer_classifier.1} parent=11 // pred_fallthru
          _
      $region12: #{transformer_classifier.1} parent=5 // pred_fallthru
        _
      %p567 = scmp.lt.s32.totalorder %s27, 2
      // Predicated region
      $region45: #{transformer_classifier.1} parent=5 // pred_check
        %p568 = pneg %p567
      $region46: #{transformer_classifier.1} parent=5 // pred_check_branch
        %570 = sbr.rel (%p568) target = $region48
      $region47: #{transformer_classifier.1} parent=5 // pred_region
        // Predicated region
        $region49: #{transformer_classifier.1} parent=47 // pred_check
          %p571 = pneg %p131
        $region50: #{transformer_classifier.1} parent=47 // pred_check_branch
          %573 = sbr.rel (%p571) target = $region52
        $region51: #{transformer_classifier.1} parent=47 // pred_region
          %p574 = scmp.lt.s32.totalorder %s27, 1
          %s575 = scalar_select %p574, %s27, 1
          %s576 = smul.addr %s575, 4
          %s577 = smul.addr %s576, 4
          %s578 = scalar_lea.vmem %s4, %s577
        $region52: #{transformer_classifier.1} parent=47 // pred_fallthru
          _
        // Predicated region
        $region53: #{transformer_classifier.1} parent=47 // pred_check
          %p579 = pneg %p157
        $region54: #{transformer_classifier.1} parent=47 // pred_check_branch
          %581 = sbr.rel (%p579) target = $region56
        $region55: #{transformer_classifier.1} parent=47 // pred_region
          %p582 = scmp.lt.s32.totalorder %s27, 1
          %s583 = scalar_select %p582, %s27, 1
          %s584 = scalar_lea.vmem %s5, %s583
        $region56: #{transformer_classifier.1} parent=47 // pred_fallthru
          _
        // Predicated region
        $region57: #{transformer_classifier.1} parent=47 // pred_check
          %p585 = pneg %p183
        $region58: #{transformer_classifier.1} parent=47 // pred_check_branch
          %587 = sbr.rel (%p585) target = $region60
        $region59: #{transformer_classifier.1} parent=47 // pred_region
          %p588 = scmp.lt.s32.totalorder %s27, 1
          %s589 = scalar_select %p588, %s27, 1
          %s590 = smul.addr %s589, 4
          %s591 = smul.addr %s590, 4
          %s592 = scalar_lea.vmem %s6, %s591
        $region60: #{transformer_classifier.1} parent=47 // pred_fallthru
          _
        // Predicated region
        $region61: #{transformer_classifier.1} parent=47 // pred_check
          %p593 = pneg %p209
        $region62: #{transformer_classifier.1} parent=47 // pred_check_branch
          %595 = sbr.rel (%p593) target = $region64
        $region63: #{transformer_classifier.1} parent=47 // pred_region
          %p596 = scmp.lt.s32.totalorder %s27, 1
          %s597 = scalar_select %p596, %s27, 1
          %s598 = scalar_lea.vmem %s7, %s597
        $region64: #{transformer_classifier.1} parent=47 // pred_fallthru
          _
        // Predicated region
        $region65: #{transformer_classifier.1} parent=47 // pred_check
          %p599 = pneg %p235
        $region66: #{transformer_classifier.1} parent=47 // pred_check_branch
          %601 = sbr.rel (%p599) target = $region68
        $region67: #{transformer_classifier.1} parent=47 // pred_region
          %p602 = scmp.lt.s32.totalorder %s27, 1
          %s603 = scalar_select %p602, %s27, 1
          %s604 = scalar_lea.vmem %s8, %s603
        $region68: #{transformer_classifier.1} parent=47 // pred_fallthru
          _
        // Predicated region
        $region69: #{transformer_classifier.1} parent=47 // pred_check
          %p605 = pneg %p261
        $region70: #{transformer_classifier.1} parent=47 // pred_check_branch
          %607 = sbr.rel (%p605) target = $region72
        $region71: #{transformer_classifier.1} parent=47 // pred_region
          %p608 = scmp.lt.s32.totalorder %s27, 1
          %s609 = scalar_select %p608, %s27, 1
          %s610 = scalar_lea.vmem %s9, %s609
        $region72: #{transformer_classifier.1} parent=47 // pred_fallthru
          _
        // Predicated region
        $region73: #{transformer_classifier.1} parent=47 // pred_check
          %p611 = pneg %p287
        $region74: #{transformer_classifier.1} parent=47 // pred_check_branch
          %613 = sbr.rel (%p611) target = $region76
        $region75: #{transformer_classifier.1} parent=47 // pred_region
          %p614 = scmp.lt.s32.totalorder %s27, 1
          %s615 = scalar_select %p614, %s27, 1
          %s616 = smul.addr %s615, 4
          %s617 = smul.addr %s616, 4
          %s618 = scalar_lea.vmem %s10, %s617
        $region76: #{transformer_classifier.1} parent=47 // pred_fallthru
          _
        // Predicated region
        $region77: #{transformer_classifier.1} parent=47 // pred_check
          %p619 = pneg %p313
        $region78: #{transformer_classifier.1} parent=47 // pred_check_branch
          %621 = sbr.rel (%p619) target = $region80
        $region79: #{transformer_classifier.1} parent=47 // pred_region
          %p622 = scmp.lt.s32.totalorder %s27, 1
          %s623 = scalar_select %p622, %s27, 1
          %s624 = scalar_lea.vmem %s11, %s623
        $region80: #{transformer_classifier.1} parent=47 // pred_fallthru
          _
        // Predicated region
        $region81: #{transformer_classifier.1} parent=47 // pred_check
          %p625 = pneg %p339
        $region82: #{transformer_classifier.1} parent=47 // pred_check_branch
          %627 = sbr.rel (%p625) target = $region84
        $region83: #{transformer_classifier.1} parent=47 // pred_region
          %p628 = scmp.lt.s32.totalorder %s27, 1
          %s629 = scalar_select %p628, %s27, 1
          %s630 = smul.addr %s629, 16
          %s631 = smul.addr %s630, 4
          %s632 = scalar_lea.vmem %s12, %s631
        $region84: #{transformer_classifier.1} parent=47 // pred_fallthru
          _
        // Predicated region
        $region85: #{transformer_classifier.1} parent=47 // pred_check
          %p633 = pneg %p365
        $region86: #{transformer_classifier.1} parent=47 // pred_check_branch
          %635 = sbr.rel (%p633) target = $region88
        $region87: #{transformer_classifier.1} parent=47 // pred_region
          %p636 = scmp.lt.s32.totalorder %s27, 1
          %s637 = scalar_select %p636, %s27, 1
          %s638 = scalar_lea.vmem %s13, %s637
        $region88: #{transformer_classifier.1} parent=47 // pred_fallthru
          _
        // Predicated region
        $region89: #{transformer_classifier.1} parent=47 // pred_check
          %p639 = pneg %p391
        $region90: #{transformer_classifier.1} parent=47 // pred_check_branch
          %641 = sbr.rel (%p639) target = $region92
        $region91: #{transformer_classifier.1} parent=47 // pred_region
          %p642 = scmp.lt.s32.totalorder %s27, 1
          %s643 = scalar_select %p642, %s27, 1
          %s644 = scalar_lea.vmem %s14, %s643
        $region92: #{transformer_classifier.1} parent=47 // pred_fallthru
          _
        // Predicated region
        $region93: #{transformer_classifier.1} parent=47 // pred_check
          %p645 = pneg %p417
        $region94: #{transformer_classifier.1} parent=47 // pred_check_branch
          %647 = sbr.rel (%p645) target = $region96
        $region95: #{transformer_classifier.1} parent=47 // pred_region
          %p648 = scmp.lt.s32.totalorder %s27, 1
          %s649 = scalar_select %p648, %s27, 1
          %s650 = scalar_lea.vmem %s15, %s649
        $region96: #{transformer_classifier.1} parent=47 // pred_fallthru
          _
      $region48: #{transformer_classifier.1} parent=5 // pred_fallthru
        _
      %p651 = scmp.le.s32.totalorder 1, %s27
      %p652 = scmp.lt.s32.totalorder %s27, 3
      %p653 = pnand %p651, %p652
      %p654 = pneg %p653
      // Predicated region
      $region97: #{transformer_classifier.1} parent=5 // pred_check
        _
      $region98: #{transformer_classifier.1} parent=5 // pred_check_branch
        %656 = sbr.rel (%p653) target = $region100
      $region99: #{transformer_classifier.1} parent=5 // pred_region
        %s657 = ssub.s32 %s27, 1
        %p658 = pneg %p48
        %p659 = pneg %p45
        %p660 = pneg %p69
        %p661 = pneg %p66
        %p662 = pneg %p90
        %p663 = pneg %p87
        %p664 = pneg %p111
        %p665 = pneg %p108
        %p666 = scmp.lt.s32.totalorder %s32, 1
        %s667 = scalar_select %p666, %s32, 1
        %s668 = smul.addr %s667, 4
        %s669 = smul.addr %s668, 4
        %s670 = scalar_lea.vmem %s4, %s669
        %p671 = pneg %p137
        %p672 = pneg %p134
        %p673 = scmp.lt.s32.totalorder %s32, 1
        %s674 = scalar_select %p673, %s32, 1
        %s675 = scalar_lea.vmem %s5, %s674
        %p676 = pneg %p163
        %p677 = pneg %p160
        %p678 = scmp.lt.s32.totalorder %s32, 1
        %s679 = scalar_select %p678, %s32, 1
        %s680 = smul.addr %s679, 4
        %s681 = smul.addr %s680, 4
        %s682 = scalar_lea.vmem %s6, %s681
        %p683 = pneg %p189
        %p684 = pneg %p186
        %p685 = scmp.lt.s32.totalorder %s32, 1
        %s686 = scalar_select %p685, %s32, 1
        %s687 = scalar_lea.vmem %s7, %s686
        %p688 = pneg %p215
        %p689 = pneg %p212
        %p690 = scmp.lt.s32.totalorder %s32, 1
        %s691 = scalar_select %p690, %s32, 1
        %s692 = scalar_lea.vmem %s8, %s691
        %p693 = pneg %p241
        %p694 = pneg %p238
        %p695 = scmp.lt.s32.totalorder %s32, 1
        %s696 = scalar_select %p695, %s32, 1
        %s697 = scalar_lea.vmem %s9, %s696
        %p698 = pneg %p267
        %p699 = pneg %p264
        %p700 = scmp.lt.s32.totalorder %s32, 1
        %s701 = scalar_select %p700, %s32, 1
        %s702 = smul.addr %s701, 4
        %s703 = smul.addr %s702, 4
        %s704 = scalar_lea.vmem %s10, %s703
        %p705 = pneg %p293
        %p706 = pneg %p290
        %p707 = scmp.lt.s32.totalorder %s32, 1
        %s708 = scalar_select %p707, %s32, 1
        %s709 = scalar_lea.vmem %s11, %s708
        %p710 = pneg %p319
        %p711 = pneg %p316
        %p712 = scmp.lt.s32.totalorder %s32, 1
        %s713 = scalar_select %p712, %s32, 1
        %s714 = smul.addr %s713, 16
        %s715 = smul.addr %s714, 4
        %s716 = scalar_lea.vmem %s12, %s715
        %p717 = pneg %p345
        %p718 = pneg %p342
        %p719 = scmp.lt.s32.totalorder %s32, 1
        %s720 = scalar_select %p719, %s32, 1
        %s721 = scalar_lea.vmem %s13, %s720
        %p722 = pneg %p371
        %p723 = pneg %p368
        %p724 = scmp.lt.s32.totalorder %s32, 1
        %s725 = scalar_select %p724, %s32, 1
        %s726 = scalar_lea.vmem %s14, %s725
        %p727 = pneg %p397
        %p728 = pneg %p394
        %p729 = scmp.lt.s32.totalorder %s32, 1
        %s730 = scalar_select %p729, %s32, 1
        %s731 = scalar_lea.vmem %s15, %s730
        %p732 = pneg %p423
        %p733 = pneg %p420
        %p734 = pneg %p444
        %p735 = pneg %p441
        %p736 = pneg %p465
        %p737 = pneg %p462
        %p738 = pneg %p486
        %p739 = pneg %p483
        %p740 = pneg %p507
        %p741 = pneg %p504
        %p742 = pneg %p528
        %p743 = pneg %p525
        %p744 = scmp.lt.s32.totalorder %s32, 1
        %s745 = scalar_select %p744, %s32, 1
        %s746 = smul.addr %s745, 4
        %s747 = smul.addr %s746, 4
        %s748 = scalar_lea.vmem %s4, %s747
        %p749 = scmp.lt.s32.totalorder %s32, 1
        %s750 = scalar_select %p749, %s32, 1
        %s751 = scalar_lea.vmem %s5, %s750
        %p752 = scmp.lt.s32.totalorder %s32, 1
        %s753 = scalar_select %p752, %s32, 1
        %s754 = smul.addr %s753, 4
        %s755 = smul.addr %s754, 4
        %s756 = scalar_lea.vmem %s6, %s755
        %p757 = scmp.lt.s32.totalorder %s32, 1
        %s758 = scalar_select %p757, %s32, 1
        %s759 = scalar_lea.vmem %s7, %s758
        %p760 = scmp.lt.s32.totalorder %s32, 1
        %s761 = scalar_select %p760, %s32, 1
        %s762 = scalar_lea.vmem %s8, %s761
        %p763 = scmp.lt.s32.totalorder %s32, 1
        %s764 = scalar_select %p763, %s32, 1
        %s765 = scalar_lea.vmem %s9, %s764
        %p766 = scmp.lt.s32.totalorder %s32, 1
        %s767 = scalar_select %p766, %s32, 1
        %s768 = smul.addr %s767, 4
        %s769 = smul.addr %s768, 4
        %s770 = scalar_lea.vmem %s10, %s769
        %p771 = scmp.lt.s32.totalorder %s32, 1
        %s772 = scalar_select %p771, %s32, 1
        %s773 = scalar_lea.vmem %s11, %s772
        %p774 = scmp.lt.s32.totalorder %s32, 1
        %s775 = scalar_select %p774, %s32, 1
        %s776 = smul.addr %s775, 16
        %s777 = smul.addr %s776, 4
        %s778 = scalar_lea.vmem %s12, %s777
        %p779 = scmp.lt.s32.totalorder %s32, 1
        %s780 = scalar_select %p779, %s32, 1
        %s781 = scalar_lea.vmem %s13, %s780
        %p782 = scmp.lt.s32.totalorder %s32, 1
        %s783 = scalar_select %p782, %s32, 1
        %s784 = scalar_lea.vmem %s14, %s783
        %p785 = scmp.lt.s32.totalorder %s32, 1
        %s786 = scalar_select %p785, %s32, 1
        %s787 = scalar_lea.vmem %s15, %s786
        %p789 = scmp.eq.s32.totalorder %s32, 0
        // Predicated region
        $region101: #{transformer_classifier.1} parent=99 // pred_check
          %p790 = pneg %p789
        $region102: #{transformer_classifier.1} parent=99 // pred_check_branch
          %792 = sbr.rel (%p790) target = $region104
        $region103: #{transformer_classifier.1} parent=99 // pred_region
          %v793 = vld [vmem:[%s0] sm:$0xff]
          %v794 = vld [vmem:[%s0 + $0x8] sm:$0xff]
          %v795 = vld [vmem:[%s2] sm:$0xf]
          %v796 = vld [vmem:[%s2 + $0x4] sm:$0xf]
          %v797 = vld [vmem:[%s3] sm:$0x1]
          %v798 = vpack.c.bf16 %v794, %v793
          %v800 = vlaneseq
          %v801 = vshrl.u32 %v800, 7
          %v802 = vsub.s32 0, %v801
          %v803 = vrot.slane %v797, %v802
          %v807 = vunpack.c.l.b16 %v795
          %v808 = vunpack.c.l.b16 %v796
          %v809 = vpack.c.b16 %v808, %v807
          %vm811 = vcmask 130048
          %v813 = vsel %vm811, %v798, 0
          %815 = vmatprep.subr.bf16.mxu0 0
          %816 = vmatpush1.bf16.msra.mxu0 %v809
          %817 = vmatprep.subr.bf16.mxu0 0
          %818 = vmatpush1.bf16.msra.mxu0 0
          %819 = vmatprep.subr.bf16.mxu0 0
          %820 = vmatpush1.bf16.msra.mxu0 0
          %821 = vmatprep.subr.bf16.mxu0 0
          %822 = vmatpush1.bf16.msra.mxu0 0
          %823 = vmatprep.subr.bf16.mxu0 0
          %824 = vmatpush1.bf16.msra.mxu0 0
          %825 = vmatprep.subr.bf16.mxu0 0
          %826 = vmatpush1.bf16.msra.mxu0 0
          %827 = vmatprep.subr.bf16.mxu0 0
          %828 = vmatpush1.bf16.msra.mxu0 0
          %829 = vmatprep.subr.bf16.mxu0 0
          %830 = vmatpush1.bf16.msra.mxu0 0
          %831 = vmatprep.subr.bf16.mxu0 0
          %832 = vmatpush1.bf16.msra.mxu0 0
          %833 = vmatprep.subr.bf16.mxu0 0
          %834 = vmatpush1.bf16.msra.mxu0 0
          %835 = vmatprep.subr.bf16.mxu0 0
          %836 = vmatpush1.bf16.msra.mxu0 0
          %837 = vmatprep.subr.bf16.mxu0 0
          %838 = vmatpush1.bf16.msra.mxu0 0
          %839 = vmatprep.subr.bf16.mxu0 0
          %840 = vmatpush1.bf16.msra.mxu0 0
          %841 = vmatprep.subr.bf16.mxu0 0
          %842 = vmatpush1.bf16.msra.mxu0 0
          %843 = vmatprep.subr.bf16.mxu0 0
          %844 = vmatpush1.bf16.msra.mxu0 0
          %845 = vmatprep.subr.bf16.mxu0 0
          %846 = vmatpush1.bf16.msra.mxu0 0
          %847 = vmatprep.mubr.bf16.mxu0 0
          %848 = vmatmul.mubr.bf16.gmra.mrb[0].mxu0 %v813
          %v849 = vpop.f32.mrb[0].mxu0
          %v850 = vadd.f32 %v803, %v849
          %v851 = vpop.f32.mrb[0].mxu0
          %v852 = vpop.f32.mrb[0].mxu0
          %v853 = vadd.f32 %v803, %v852
          %v854 = vpop.f32.mrb[0].mxu0
          %855 = vdwg.mxu0
          %v856 = vld [vmem:[%s1] sm:$0xff]
          %v857 = vadd.f32 %v850, %v856
          %v858 = vadd.f32 %v853, %v856
          %vm859 = vcmask 261120
          %860 = vst.msk [vmem:[#allocation2] sm:$0xff] %vm859, %v857
          %861 = vst.msk [vmem:[#allocation2 + $0x8] sm:$0xff] %vm859, %v858
        $region104: #{transformer_classifier.1} parent=99 // pred_fallthru
          _
        %v862 = vld [vmem:[#allocation2] sm:$0xff]
        %v863 = vld [vmem:[#allocation2 + $0x8] sm:$0xff]
        %v864 = vld [vmem:[%s748] sm:$0xf]
        %v865 = vld [vmem:[%s748 + $0x4] sm:$0xf]
        %v866 = vld [vmem:[%s748 + $0x8] sm:$0xf]
        %v867 = vld [vmem:[%s748 + $0xc] sm:$0xf]
        %v868 = vld [vmem:[%s751] sm:$0x1]
        %v869 = vpack.c.bf16 %v863, %v862
        %v871 = vlaneseq
        %v872 = vshrl.u32 %v871, 7
        %v873 = vsub.s32 0, %v872
        %v874 = vrot.slane %v868, %v873
        %v880 = vunpack.c.l.b16 %v864
        %v881 = vunpack.c.l.b16 %v865
        %v882 = vunpack.c.l.b16 %v866
        %v883 = vunpack.c.l.b16 %v867
        %v884 = vpack.c.b16 %v881, %v880
        %v885 = vpack.c.b16 %v883, %v882
        %vm888 = vcmask 261120
        %v890 = vsel %vm888, %v869, 0
        %892 = vmatprep.subr.bf16.mxu0 0
        %893 = vmatpush1.bf16.msra.mxu0 %v884
        %894 = vmatprep.subr.bf16.mxu0 0
        %895 = vmatpush1.bf16.msra.mxu0 %v885
        %896 = vmatprep.subr.bf16.mxu0 0
        %897 = vmatpush1.bf16.msra.mxu0 0
        %898 = vmatprep.subr.bf16.mxu0 0
        %899 = vmatpush1.bf16.msra.mxu0 0
        %900 = vmatprep.subr.bf16.mxu0 0
        %901 = vmatpush1.bf16.msra.mxu0 0
        %902 = vmatprep.subr.bf16.mxu0 0
        %903 = vmatpush1.bf16.msra.mxu0 0
        %904 = vmatprep.subr.bf16.mxu0 0
        %905 = vmatpush1.bf16.msra.mxu0 0
        %906 = vmatprep.subr.bf16.mxu0 0
        %907 = vmatpush1.bf16.msra.mxu0 0
        %908 = vmatprep.subr.bf16.mxu0 0
        %909 = vmatpush1.bf16.msra.mxu0 0
        %910 = vmatprep.subr.bf16.mxu0 0
        %911 = vmatpush1.bf16.msra.mxu0 0
        %912 = vmatprep.subr.bf16.mxu0 0
        %913 = vmatpush1.bf16.msra.mxu0 0
        %914 = vmatprep.subr.bf16.mxu0 0
        %915 = vmatpush1.bf16.msra.mxu0 0
        %916 = vmatprep.subr.bf16.mxu0 0
        %917 = vmatpush1.bf16.msra.mxu0 0
        %918 = vmatprep.subr.bf16.mxu0 0
        %919 = vmatpush1.bf16.msra.mxu0 0
        %920 = vmatprep.subr.bf16.mxu0 0
        %921 = vmatpush1.bf16.msra.mxu0 0
        %922 = vmatprep.subr.bf16.mxu0 0
        %923 = vmatpush1.bf16.msra.mxu0 0
        %924 = vmatprep.mubr.bf16.mxu0 0
        %925 = vmatmul.mubr.bf16.gmra.mrb[0].mxu0 %v890
        %v926 = vpop.f32.mrb[0].mxu0
        %v927 = vadd.f32 %v874, %v926
        %v928 = vpop.f32.mrb[0].mxu0
        %v929 = vpop.f32.mrb[0].mxu0
        %v930 = vadd.f32 %v874, %v929
        %v931 = vpop.f32.mrb[0].mxu0
        %932 = vdwg.mxu0
        %v933 = vmul.f32 %v927, 0.35355338
        %v934 = vmul.f32 %v930, 0.35355338
        %v935 = vpack.c.bf16 %v933, %v933
        %v936 = vpack.c.bf16 %v934, %v934
        %v937 = vpack.c.bf16 %v927, %v927
        %v938 = vpack.c.bf16 %v930, %v930
        %940 = vrot.lane.b32.xlu0 %v937, 96
        %v941 = vpop.permute.xlu0 %940
        %vm942 = vcmask 64512
        %v944 = vsel %vm942, %v935, 0
        %v947 = vsel %vm942, %v941, 0
        %949 = vmatprep.subr.bf16.mxu0 0
        %950 = vmatpush1.bf16.xpose.msra.mxu0 %v947
        %951 = vmatprep.subr.bf16.mxu0 0
        %952 = vmatpush1.bf16.xpose.msra.mxu0 0
        %953 = vmatprep.subr.bf16.mxu0 0
        %954 = vmatpush1.bf16.xpose.msra.mxu0 0
        %955 = vmatprep.subr.bf16.mxu0 0
        %956 = vmatpush1.bf16.xpose.msra.mxu0 0
        %957 = vmatprep.subr.bf16.mxu0 0
        %958 = vmatpush1.bf16.xpose.msra.mxu0 0
        %959 = vmatprep.subr.bf16.mxu0 0
        %960 = vmatpush1.bf16.xpose.msra.mxu0 0
        %961 = vmatprep.subr.bf16.mxu0 0
        %962 = vmatpush1.bf16.xpose.msra.mxu0 0
        %963 = vmatprep.subr.bf16.mxu0 0
        %964 = vmatpush1.bf16.xpose.msra.mxu0 0
        %965 = vmatprep.subr.bf16.mxu0 0
        %966 = vmatpush1.bf16.xpose.msra.mxu0 0
        %967 = vmatprep.subr.bf16.mxu0 0
        %968 = vmatpush1.bf16.xpose.msra.mxu0 0
        %969 = vmatprep.subr.bf16.mxu0 0
        %970 = vmatpush1.bf16.xpose.msra.mxu0 0
        %971 = vmatprep.subr.bf16.mxu0 0
        %972 = vmatpush1.bf16.xpose.msra.mxu0 0
        %973 = vmatprep.subr.bf16.mxu0 0
        %974 = vmatpush1.bf16.xpose.msra.mxu0 0
        %975 = vmatprep.subr.bf16.mxu0 0
        %976 = vmatpush1.bf16.xpose.msra.mxu0 0
        %977 = vmatprep.subr.bf16.mxu0 0
        %978 = vmatpush1.bf16.xpose.msra.mxu0 0
        %979 = vmatprep.subr.bf16.mxu0 0
        %980 = vmatpush1.bf16.xpose.msra.mxu0 0
        %981 = vmatprep.mubr.bf16.mxu0 0
        %982 = vmatmul.mubr.bf16.gmra.mrb[0].mxu0 %v944
        %v983 = vpop.f32.mrb[0].mxu0
        %v984 = vadd.f32 0.0, %v983
        %v985 = vpop.f32.mrb[0].mxu0
        %v986 = vpop.f32.mrb[0].mxu0
        %v987 = vpop.f32.mrb[0].mxu0
        %988 = vdwg.mxu0
        %990 = vrot.lane.b32.xlu0 %v938, 96
        %v991 = vpop.permute.xlu0 %990
        %v993 = vsel %vm942, %v936, 0
        %v996 = vsel %vm942, %v991, 0
        %998 = vmatprep.subr.bf16.mxu0 0
        %999 = vmatpush1.bf16.xpose.msra.mxu0 %v996
        %1000 = vmatprep.subr.bf16.mxu0 0
        %1001 = vmatpush1.bf16.xpose.msra.mxu0 0
        %1002 = vmatprep.subr.bf16.mxu0 0
        %1003 = vmatpush1.bf16.xpose.msra.mxu0 0
        %1004 = vmatprep.subr.bf16.mxu0 0
        %1005 = vmatpush1.bf16.xpose.msra.mxu0 0
        %1006 = vmatprep.subr.bf16.mxu0 0
        %1007 = vmatpush1.bf16.xpose.msra.mxu0 0
        %1008 = vmatprep.subr.bf16.mxu0 0
        %1009 = vmatpush1.bf16.xpose.msra.mxu0 0
        %1010 = vmatprep.subr.bf16.mxu0 0
        %1011 = vmatpush1.bf16.xpose.msra.mxu0 0
        %1012 = vmatprep.subr.bf16.mxu0 0
        %1013 = vmatpush1.bf16.xpose.msra.mxu0 0
        %1014 = vmatprep.subr.bf16.mxu0 0
        %1015 = vmatpush1.bf16.xpose.msra.mxu0 0
        %1016 = vmatprep.subr.bf16.mxu0 0
        %1017 = vmatpush1.bf16.xpose.msra.mxu0 0
        %1018 = vmatprep.subr.bf16.mxu0 0
        %1019 = vmatpush1.bf16.xpose.msra.mxu0 0
        %1020 = vmatprep.subr.bf16.mxu0 0
        %1021 = vmatpush1.bf16.xpose.msra.mxu0 0
        %1022 = vmatprep.subr.bf16.mxu0 0
        %1023 = vmatpush1.bf16.xpose.msra.mxu0 0
        %1024 = vmatprep.subr.bf16.mxu0 0
        %1025 = vmatpush1.bf16.xpose.msra.mxu0 0
        %1026 = vmatprep.subr.bf16.mxu0 0
        %1027 = vmatpush1.bf16.xpose.msra.mxu0 0
        %1028 = vmatprep.subr.bf16.mxu0 0
        %1029 = vmatpush1.bf16.xpose.msra.mxu0 0
        %1030 = vmatprep.mubr.bf16.mxu0 0
        %1031 = vmatmul.mubr.bf16.gmra.mrb[0].mxu0 %v993
        %v1032 = vpop.f32.mrb[0].mxu0
        %v1033 = vadd.f32 0.0, %v1032
        %v1034 = vpop.f32.mrb[0].mxu0
        %v1035 = vpop.f32.mrb[0].mxu0
        %v1036 = vpop.f32.mrb[0].mxu0
        %1037 = vdwg.mxu0
        %v1038 = vsel %vm942, %v984, -inf
        %1039 = vmax.xlane.f32.xlu0 %v1038
        %v1040 = vpop.xlane.xlu0 %1039
        %v1041 = vsel %vm942, %v1033, -inf
        %1042 = vmax.xlane.f32.xlu0 %v1041
        %v1043 = vpop.xlane.xlu0 %1042
        %v1044 = vsub.f32 %v984, %v1040
        %v1045 = vsub.f32 %v1033, %v1043
        %v1046 = vmul.f32 %v1044, 1.442695
        %v1047 = vpow.pop %v1046
        %v1048 = vmul.f32 %v1045, 1.442695
        %v1049 = vpow.pop %v1048
        %v1050 = vsel %vm942, %v1047, 0.0
        %1051 = vadd.xlane.f32.xlu0 %v1050
        %v1052 = vpop.xlane.xlu0 %1051
        %v1053 = vsel %vm942, %v1049, 0.0
        %1054 = vadd.xlane.f32.xlu0 %v1053
        %v1055 = vpop.xlane.xlu0 %1054
        %v1056 = vrcp.pop %v1052
        %v1057 = vrcp.pop %v1055
        %v1058 = vmul.f32 %v1047, %v1056
        %v1059 = vmul.f32 %v1049, %v1057
        %v1060 = vpack.c.bf16 %v1058, %v1058
        %v1061 = vpack.c.bf16 %v1059, %v1059
        %1062 = vrot.lane.b32.xlu0 %v937, 64
        %v1063 = vpop.permute.xlu0 %1062
        %v1065 = vsel %vm942, %v1060, 0
        %vm1067 = vcmask 1043456
        %v1069 = vsel %vm1067, %v1063, 0
        %1071 = vmatprep.subr.bf16.mxu0 0
        %1072 = vmatpush1.bf16.msra.mxu0 %v1069
        %1073 = vmatprep.subr.bf16.mxu0 0
        %1074 = vmatpush1.bf16.msra.mxu0 0
        %1075 = vmatprep.subr.bf16.mxu0 0
        %1076 = vmatpush1.bf16.msra.mxu0 0
        %1077 = vmatprep.subr.bf16.mxu0 0
        %1078 = vmatpush1.bf16.msra.mxu0 0
        %1079 = vmatprep.subr.bf16.mxu0 0
        %1080 = vmatpush1.bf16.msra.mxu0 0
        %1081 = vmatprep.subr.bf16.mxu0 0
        %1082 = vmatpush1.bf16.msra.mxu0 0
        %1083 = vmatprep.subr.bf16.mxu0 0
        %1084 = vmatpush1.bf16.msra.mxu0 0
        %1085 = vmatprep.subr.bf16.mxu0 0
        %1086 = vmatpush1.bf16.msra.mxu0 0
        %1087 = vmatprep.subr.bf16.mxu0 0
        %1088 = vmatpush1.bf16.msra.mxu0 0
        %1089 = vmatprep.subr.bf16.mxu0 0
        %1090 = vmatpush1.bf16.msra.mxu0 0
        %1091 = vmatprep.subr.bf16.mxu0 0
        %1092 = vmatpush1.bf16.msra.mxu0 0
        %1093 = vmatprep.subr.bf16.mxu0 0
        %1094 = vmatpush1.bf16.msra.mxu0 0
        %1095 = vmatprep.subr.bf16.mxu0 0
        %1096 = vmatpush1.bf16.msra.mxu0 0
        %1097 = vmatprep.subr.bf16.mxu0 0
        %1098 = vmatpush1.bf16.msra.mxu0 0
        %1099 = vmatprep.subr.bf16.mxu0 0
        %1100 = vmatpush1.bf16.msra.mxu0 0
        %1101 = vmatprep.subr.bf16.mxu0 0
        %1102 = vmatpush1.bf16.msra.mxu0 0
        %1103 = vmatprep.mubr.bf16.mxu0 0
        %1104 = vmatmul.mubr.bf16.gmra.mrb[0].mxu0 %v1065
        %v1105 = vpop.f32.mrb[0].mxu0
        %v1106 = vadd.f32 0.0, %v1105
        %v1107 = vpop.f32.mrb[0].mxu0
        %v1108 = vpop.f32.mrb[0].mxu0
        %v1109 = vpop.f32.mrb[0].mxu0
        %1110 = vdwg.mxu0
        %1111 = vrot.lane.b32.xlu0 %v938, 64
        %v1112 = vpop.permute.xlu0 %1111
        %v1114 = vsel %vm942, %v1061, 0
        %v1117 = vsel %vm1067, %v1112, 0
        %1119 = vmatprep.subr.bf16.mxu0 0
        %1120 = vmatpush1.bf16.msra.mxu0 %v1117
        %1121 = vmatprep.subr.bf16.mxu0 0
        %1122 = vmatpush1.bf16.msra.mxu0 0
        %1123 = vmatprep.subr.bf16.mxu0 0
        %1124 = vmatpush1.bf16.msra.mxu0 0
        %1125 = vmatprep.subr.bf16.mxu0 0
        %1126 = vmatpush1.bf16.msra.mxu0 0
        %1127 = vmatprep.subr.bf16.mxu0 0
        %1128 = vmatpush1.bf16.msra.mxu0 0
        %1129 = vmatprep.subr.bf16.mxu0 0
        %1130 = vmatpush1.bf16.msra.mxu0 0
        %1131 = vmatprep.subr.bf16.mxu0 0
        %1132 = vmatpush1.bf16.msra.mxu0 0
        %1133 = vmatprep.subr.bf16.mxu0 0
        %1134 = vmatpush1.bf16.msra.mxu0 0
        %1135 = vmatprep.subr.bf16.mxu0 0
        %1136 = vmatpush1.bf16.msra.mxu0 0
        %1137 = vmatprep.subr.bf16.mxu0 0
        %1138 = vmatpush1.bf16.msra.mxu0 0
        %1139 = vmatprep.subr.bf16.mxu0 0
        %1140 = vmatpush1.bf16.msra.mxu0 0
        %1141 = vmatprep.subr.bf16.mxu0 0
        %1142 = vmatpush1.bf16.msra.mxu0 0
        %1143 = vmatprep.subr.bf16.mxu0 0
        %1144 = vmatpush1.bf16.msra.mxu0 0
        %1145 = vmatprep.subr.bf16.mxu0 0
        %1146 = vmatpush1.bf16.msra.mxu0 0
        %1147 = vmatprep.subr.bf16.mxu0 0
        %1148 = vmatpush1.bf16.msra.mxu0 0
        %1149 = vmatprep.subr.bf16.mxu0 0
        %1150 = vmatpush1.bf16.msra.mxu0 0
        %1151 = vmatprep.mubr.bf16.mxu0 0
        %1152 = vmatmul.mubr.bf16.gmra.mrb[0].mxu0 %v1114
        %v1153 = vpop.f32.mrb[0].mxu0
        %v1154 = vadd.f32 0.0, %v1153
        %v1155 = vpop.f32.mrb[0].mxu0
        %v1156 = vpop.f32.mrb[0].mxu0
        %v1157 = vpop.f32.mrb[0].mxu0
        %1158 = vdwg.mxu0
        %1160 = vrot.lane.b32.xlu0 %v935, 120
        %v1161 = vpop.permute.xlu0 %1160
        %1162 = vrot.lane.b32.xlu0 %v937, 88
        %v1163 = vpop.permute.xlu0 %1162
        %v1165 = vsel %vm942, %v1161, 0
        %v1168 = vsel %vm942, %v1163, 0
        %1170 = vmatprep.subr.bf16.mxu0 0
        %1171 = vmatpush1.bf16.xpose.msra.mxu0 %v1168
        %1172 = vmatprep.subr.bf16.mxu0 0
        %1173 = vmatpush1.bf16.xpose.msra.mxu0 0
        %1174 = vmatprep.subr.bf16.mxu0 0
        %1175 = vmatpush1.bf16.xpose.msra.mxu0 0
        %1176 = vmatprep.subr.bf16.mxu0 0
        %1177 = vmatpush1.bf16.xpose.msra.mxu0 0
        %1178 = vmatprep.subr.bf16.mxu0 0
        %1179 = vmatpush1.bf16.xpose.msra.mxu0 0
        %1180 = vmatprep.subr.bf16.mxu0 0
        %1181 = vmatpush1.bf16.xpose.msra.mxu0 0
        %1182 = vmatprep.subr.bf16.mxu0 0
        %1183 = vmatpush1.bf16.xpose.msra.mxu0 0
        %1184 = vmatprep.subr.bf16.mxu0 0
        %1185 = vmatpush1.bf16.xpose.msra.mxu0 0
        %1186 = vmatprep.subr.bf16.mxu0 0
        %1187 = vmatpush1.bf16.xpose.msra.mxu0 0
        %1188 = vmatprep.subr.bf16.mxu0 0
        %1189 = vmatpush1.bf16.xpose.msra.mxu0 0
        %1190 = vmatprep.subr.bf16.mxu0 0
        %1191 = vmatpush1.bf16.xpose.msra.mxu0 0
        %1192 = vmatprep.subr.bf16.mxu0 0
        %1193 = vmatpush1.bf16.xpose.msra.mxu0 0
        %1194 = vmatprep.subr.bf16.mxu0 0
        %1195 = vmatpush1.bf16.xpose.msra.mxu0 0
        %1196 = vmatprep.subr.bf16.mxu0 0
        %1197 = vmatpush1.bf16.xpose.msra.mxu0 0
        %1198 = vmatprep.subr.bf16.mxu0 0
        %1199 = vmatpush1.bf16.xpose.msra.mxu0 0
        %1200 = vmatprep.subr.bf16.mxu0 0
        %1201 = vmatpush1.bf16.xpose.msra.mxu0 0
        %1202 = vmatprep.mubr.bf16.mxu0 0
        %1203 = vmatmul.mubr.bf16.gmra.mrb[0].mxu0 %v1165
        %v1204 = vpop.f32.mrb[0].mxu0
        %v1205 = vadd.f32 0.0, %v1204
        %v1206 = vpop.f32.mrb[0].mxu0
        %v1207 = vpop.f32.mrb[0].mxu0
        %v1208 = vpop.f32.mrb[0].mxu0
        %1209 = vdwg.mxu0
        %1211 = vrot.lane.b32.xlu0 %v936, 120
        %v1212 = vpop.permute.xlu0 %1211
        %1213 = vrot.lane.b32.xlu0 %v938, 88
        %v1214 = vpop.permute.xlu0 %1213
        %v1216 = vsel %vm942, %v1212, 0
        %v1219 = vsel %vm942, %v1214, 0
        %1221 = vmatprep.subr.bf16.mxu0 0
        %1222 = vmatpush1.bf16.xpose.msra.mxu0 %v1219
        %1223 = vmatprep.subr.bf16.mxu0 0
        %1224 = vmatpush1.bf16.xpose.msra.mxu0 0
        %1225 = vmatprep.subr.bf16.mxu0 0
        %1226 = vmatpush1.bf16.xpose.msra.mxu0 0
        %1227 = vmatprep.subr.bf16.mxu0 0
        %1228 = vmatpush1.bf16.xpose.msra.mxu0 0
        %1229 = vmatprep.subr.bf16.mxu0 0
        %1230 = vmatpush1.bf16.xpose.msra.mxu0 0
        %1231 = vmatprep.subr.bf16.mxu0 0
        %1232 = vmatpush1.bf16.xpose.msra.mxu0 0
        %1233 = vmatprep.subr.bf16.mxu0 0
        %1234 = vmatpush1.bf16.xpose.msra.mxu0 0
        %1235 = vmatprep.subr.bf16.mxu0 0
        %1236 = vmatpush1.bf16.xpose.msra.mxu0 0
        %1237 = vmatprep.subr.bf16.mxu0 0
        %1238 = vmatpush1.bf16.xpose.msra.mxu0 0
        %1239 = vmatprep.subr.bf16.mxu0 0
        %1240 = vmatpush1.bf16.xpose.msra.mxu0 0
        %1241 = vmatprep.subr.bf16.mxu0 0
        %1242 = vmatpush1.bf16.xpose.msra.mxu0 0
        %1243 = vmatprep.subr.bf16.mxu0 0
        %1244 = vmatpush1.bf16.xpose.msra.mxu0 0
        %1245 = vmatprep.subr.bf16.mxu0 0
        %1246 = vmatpush1.bf16.xpose.msra.mxu0 0
        %1247 = vmatprep.subr.bf16.mxu0 0
        %1248 = vmatpush1.bf16.xpose.msra.mxu0 0
        %1249 = vmatprep.subr.bf16.mxu0 0
        %1250 = vmatpush1.bf16.xpose.msra.mxu0 0
        %1251 = vmatprep.subr.bf16.mxu0 0
        %1252 = vmatpush1.bf16.xpose.msra.mxu0 0
        %1253 = vmatprep.mubr.bf16.mxu0 0
        %1254 = vmatmul.mubr.bf16.gmra.mrb[0].mxu0 %v1216
        %v1255 = vpop.f32.mrb[0].mxu0
        %v1256 = vadd.f32 0.0, %v1255
        %v1257 = vpop.f32.mrb[0].mxu0
        %v1258 = vpop.f32.mrb[0].mxu0
        %v1259 = vpop.f32.mrb[0].mxu0
        %1260 = vdwg.mxu0
        %v1261 = vsel %vm942, %v1205, -inf
        %1262 = vmax.xlane.f32.xlu0 %v1261
        %v1263 = vpop.xlane.xlu0 %1262
        %v1264 = vsel %vm942, %v1256, -inf
        %1265 = vmax.xlane.f32.xlu0 %v1264
        %v1266 = vpop.xlane.xlu0 %1265
        %v1267 = vsub.f32 %v1205, %v1263
        %v1268 = vsub.f32 %v1256, %v1266
        %v1269 = vmul.f32 %v1267, 1.442695
        %v1270 = vpow.pop %v1269
        %v1271 = vmul.f32 %v1268, 1.442695
        %v1272 = vpow.pop %v1271
        %v1273 = vsel %vm942, %v1270, 0.0
        %1274 = vadd.xlane.f32.xlu0 %v1273
        %v1275 = vpop.xlane.xlu0 %1274
        %v1276 = vsel %vm942, %v1272, 0.0
        %1277 = vadd.xlane.f32.xlu0 %v1276
        %v1278 = vpop.xlane.xlu0 %1277
        %v1279 = vrcp.pop %v1275
        %v1280 = vrcp.pop %v1278
        %v1281 = vmul.f32 %v1270, %v1279
        %v1282 = vmul.f32 %v1272, %v1280
        %v1283 = vpack.c.bf16 %v1281, %v1281
        %v1284 = vpack.c.bf16 %v1282, %v1282
        %1285 = vrot.lane.b32.xlu0 %v937, 56
        %v1286 = vpop.permute.xlu0 %1285
        %v1288 = vsel %vm942, %v1283, 0
        %v1291 = vsel %vm1067, %v1286, 0
        %1293 = vmatprep.subr.bf16.mxu0 0
        %1294 = vmatpush1.bf16.msra.mxu0 %v1291
        %1295 = vmatprep.subr.bf16.mxu0 0
        %1296 = vmatpush1.bf16.msra.mxu0 0
        %1297 = vmatprep.subr.bf16.mxu0 0
        %1298 = vmatpush1.bf16.msra.mxu0 0
        %1299 = vmatprep.subr.bf16.mxu0 0
        %1300 = vmatpush1.bf16.msra.mxu0 0
        %1301 = vmatprep.subr.bf16.mxu0 0
        %1302 = vmatpush1.bf16.msra.mxu0 0
        %1303 = vmatprep.subr.bf16.mxu0 0
        %1304 = vmatpush1.bf16.msra.mxu0 0
        %1305 = vmatprep.subr.bf16.mxu0 0
        %1306 = vmatpush1.bf16.msra.mxu0 0
        %1307 = vmatprep.subr.bf16.mxu0 0
        %1308 = vmatpush1.bf16.msra.mxu0 0
        %1309 = vmatprep.subr.bf16.mxu0 0
        %1310 = vmatpush1.bf16.msra.mxu0 0
        %1311 = vmatprep.subr.bf16.mxu0 0
        %1312 = vmatpush1.bf16.msra.mxu0 0
        %1313 = vmatprep.subr.bf16.mxu0 0
        %1314 = vmatpush1.bf16.msra.mxu0 0
        %1315 = vmatprep.subr.bf16.mxu0 0
        %1316 = vmatpush1.bf16.msra.mxu0 0
        %1317 = vmatprep.subr.bf16.mxu0 0
        %1318 = vmatpush1.bf16.msra.mxu0 0
        %1319 = vmatprep.subr.bf16.mxu0 0
        %1320 = vmatpush1.bf16.msra.mxu0 0
        %1321 = vmatprep.subr.bf16.mxu0 0
        %1322 = vmatpush1.bf16.msra.mxu0 0
        %1323 = vmatprep.subr.bf16.mxu0 0
        %1324 = vmatpush1.bf16.msra.mxu0 0
        %1325 = vmatprep.mubr.bf16.mxu0 0
        %1326 = vmatmul.mubr.bf16.gmra.mrb[0].mxu0 %v1288
        %v1327 = vpop.f32.mrb[0].mxu0
        %v1328 = vadd.f32 0.0, %v1327
        %v1329 = vpop.f32.mrb[0].mxu0
        %v1330 = vpop.f32.mrb[0].mxu0
        %v1331 = vpop.f32.mrb[0].mxu0
        %1332 = vdwg.mxu0
        %1333 = vrot.lane.b32.xlu0 %v938, 56
        %v1334 = vpop.permute.xlu0 %1333
        %v1336 = vsel %vm942, %v1284, 0
        %v1339 = vsel %vm1067, %v1334, 0
        %1341 = vmatprep.subr.bf16.mxu0 0
        %1342 = vmatpush1.bf16.msra.mxu0 %v1339
        %1343 = vmatprep.subr.bf16.mxu0 0
        %1344 = vmatpush1.bf16.msra.mxu0 0
        %1345 = vmatprep.subr.bf16.mxu0 0
        %1346 = vmatpush1.bf16.msra.mxu0 0
        %1347 = vmatprep.subr.bf16.mxu0 0
        %1348 = vmatpush1.bf16.msra.mxu0 0
        %1349 = vmatprep.subr.bf16.mxu0 0
        %1350 = vmatpush1.bf16.msra.mxu0 0
        %1351 = vmatprep.subr.bf16.mxu0 0
        %1352 = vmatpush1.bf16.msra.mxu0 0
        %1353 = vmatprep.subr.bf16.mxu0 0
        %1354 = vmatpush1.bf16.msra.mxu0 0
        %1355 = vmatprep.subr.bf16.mxu0 0
        %1356 = vmatpush1.bf16.msra.mxu0 0
        %1357 = vmatprep.subr.bf16.mxu0 0
        %1358 = vmatpush1.bf16.msra.mxu0 0
        %1359 = vmatprep.subr.bf16.mxu0 0
        %1360 = vmatpush1.bf16.msra.mxu0 0
        %1361 = vmatprep.subr.bf16.mxu0 0
        %1362 = vmatpush1.bf16.msra.mxu0 0
        %1363 = vmatprep.subr.bf16.mxu0 0
        %1364 = vmatpush1.bf16.msra.mxu0 0
        %1365 = vmatprep.subr.bf16.mxu0 0
        %1366 = vmatpush1.bf16.msra.mxu0 0
        %1367 = vmatprep.subr.bf16.mxu0 0
        %1368 = vmatpush1.bf16.msra.mxu0 0
        %1369 = vmatprep.subr.bf16.mxu0 0
        %1370 = vmatpush1.bf16.msra.mxu0 0
        %1371 = vmatprep.subr.bf16.mxu0 0
        %1372 = vmatpush1.bf16.msra.mxu0 0
        %1373 = vmatprep.mubr.bf16.mxu0 0
        %1374 = vmatmul.mubr.bf16.gmra.mrb[0].mxu0 %v1336
        %v1375 = vpop.f32.mrb[0].mxu0
        %v1376 = vadd.f32 0.0, %v1375
        %v1377 = vpop.f32.mrb[0].mxu0
        %v1378 = vpop.f32.mrb[0].mxu0
        %v1379 = vpop.f32.mrb[0].mxu0
        %1380 = vdwg.mxu0
        %1381 = vrot.lane.b32.xlu0 %v935, 112
        %v1382 = vpop.permute.xlu0 %1381
        %1383 = vrot.lane.b32.xlu0 %v937, 80
        %v1384 = vpop.permute.xlu0 %1383
        %v1386 = vsel %vm942, %v1382, 0
        %v1389 = vsel %vm942, %v1384, 0
        %1391 = vmatprep.subr.bf16.mxu0 0
        %1392 = vmatpush1.bf16.xpose.msra.mxu0 %v1389
        %1393 = vmatprep.subr.bf16.mxu0 0
        %1394 = vmatpush1.bf16.xpose.msra.mxu0 0
        %1395 = vmatprep.subr.bf16.mxu0 0
        %1396 = vmatpush1.bf16.xpose.msra.mxu0 0
        %1397 = vmatprep.subr.bf16.mxu0 0
        %1398 = vmatpush1.bf16.xpose.msra.mxu0 0
        %1399 = vmatprep.subr.bf16.mxu0 0
        %1400 = vmatpush1.bf16.xpose.msra.mxu0 0
        %1401 = vmatprep.subr.bf16.mxu0 0
        %1402 = vmatpush1.bf16.xpose.msra.mxu0 0
        %1403 = vmatprep.subr.bf16.mxu0 0
        %1404 = vmatpush1.bf16.xpose.msra.mxu0 0
        %1405 = vmatprep.subr.bf16.mxu0 0
        %1406 = vmatpush1.bf16.xpose.msra.mxu0 0
        %1407 = vmatprep.subr.bf16.mxu0 0
        %1408 = vmatpush1.bf16.xpose.msra.mxu0 0
        %1409 = vmatprep.subr.bf16.mxu0 0
        %1410 = vmatpush1.bf16.xpose.msra.mxu0 0
        %1411 = vmatprep.subr.bf16.mxu0 0
        %1412 = vmatpush1.bf16.xpose.msra.mxu0 0
        %1413 = vmatprep.subr.bf16.mxu0 0
        %1414 = vmatpush1.bf16.xpose.msra.mxu0 0
        %1415 = vmatprep.subr.bf16.mxu0 0
        %1416 = vmatpush1.bf16.xpose.msra.mxu0 0
        %1417 = vmatprep.subr.bf16.mxu0 0
        %1418 = vmatpush1.bf16.xpose.msra.mxu0 0
        %1419 = vmatprep.subr.bf16.mxu0 0
        %1420 = vmatpush1.bf16.xpose.msra.mxu0 0
        %1421 = vmatprep.subr.bf16.mxu0 0
        %1422 = vmatpush1.bf16.xpose.msra.mxu0 0
        %1423 = vmatprep.mubr.bf16.mxu0 0
        %1424 = vmatmul.mubr.bf16.gmra.mrb[0].mxu0 %v1386
        %v1425 = vpop.f32.mrb[0].mxu0
        %v1426 = vadd.f32 0.0, %v1425
        %v1427 = vpop.f32.mrb[0].mxu0
        %v1428 = vpop.f32.mrb[0].mxu0
        %v1429 = vpop.f32.mrb[0].mxu0
        %1430 = vdwg.mxu0
        %1431 = vrot.lane.b32.xlu0 %v936, 112
        %v1432 = vpop.permute.xlu0 %1431
        %1433 = vrot.lane.b32.xlu0 %v938, 80
        %v1434 = vpop.permute.xlu0 %1433
        %v1436 = vsel %vm942, %v1432, 0
        %v1439 = vsel %vm942, %v1434, 0
        %1441 = vmatprep.subr.bf16.mxu0 0
        %1442 = vmatpush1.bf16.xpose.msra.mxu0 %v1439
        %1443 = vmatprep.subr.bf16.mxu0 0
        %1444 = vmatpush1.bf16.xpose.msra.mxu0 0
        %1445 = vmatprep.subr.bf16.mxu0 0
        %1446 = vmatpush1.bf16.xpose.msra.mxu0 0
        %1447 = vmatprep.subr.bf16.mxu0 0
        %1448 = vmatpush1.bf16.xpose.msra.mxu0 0
        %1449 = vmatprep.subr.bf16.mxu0 0
        %1450 = vmatpush1.bf16.xpose.msra.mxu0 0
        %1451 = vmatprep.subr.bf16.mxu0 0
        %1452 = vmatpush1.bf16.xpose.msra.mxu0 0
        %1453 = vmatprep.subr.bf16.mxu0 0
        %1454 = vmatpush1.bf16.xpose.msra.mxu0 0
        %1455 = vmatprep.subr.bf16.mxu0 0
        %1456 = vmatpush1.bf16.xpose.msra.mxu0 0
        %1457 = vmatprep.subr.bf16.mxu0 0
        %1458 = vmatpush1.bf16.xpose.msra.mxu0 0
        %1459 = vmatprep.subr.bf16.mxu0 0
        %1460 = vmatpush1.bf16.xpose.msra.mxu0 0
        %1461 = vmatprep.subr.bf16.mxu0 0
        %1462 = vmatpush1.bf16.xpose.msra.mxu0 0
        %1463 = vmatprep.subr.bf16.mxu0 0
        %1464 = vmatpush1.bf16.xpose.msra.mxu0 0
        %1465 = vmatprep.subr.bf16.mxu0 0
        %1466 = vmatpush1.bf16.xpose.msra.mxu0 0
        %1467 = vmatprep.subr.bf16.mxu0 0
        %1468 = vmatpush1.bf16.xpose.msra.mxu0 0
        %1469 = vmatprep.subr.bf16.mxu0 0
        %1470 = vmatpush1.bf16.xpose.msra.mxu0 0
        %1471 = vmatprep.subr.bf16.mxu0 0
        %1472 = vmatpush1.bf16.xpose.msra.mxu0 0
        %1473 = vmatprep.mubr.bf16.mxu0 0
        %1474 = vmatmul.mubr.bf16.gmra.mrb[0].mxu0 %v1436
        %v1475 = vpop.f32.mrb[0].mxu0
        %v1476 = vadd.f32 0.0, %v1475
        %v1477 = vpop.f32.mrb[0].mxu0
        %v1478 = vpop.f32.mrb[0].mxu0
        %v1479 = vpop.f32.mrb[0].mxu0
        %1480 = vdwg.mxu0
        %v1481 = vsel %vm942, %v1426, -inf
        %1482 = vmax.xlane.f32.xlu0 %v1481
        %v1483 = vpop.xlane.xlu0 %1482
        %v1484 = vsel %vm942, %v1476, -inf
        %1485 = vmax.xlane.f32.xlu0 %v1484
        %v1486 = vpop.xlane.xlu0 %1485
        %v1487 = vsub.f32 %v1426, %v1483
        %v1488 = vsub.f32 %v1476, %v1486
        %v1489 = vmul.f32 %v1487, 1.442695
        %v1490 = vpow.pop %v1489
        %v1491 = vmul.f32 %v1488, 1.442695
        %v1492 = vpow.pop %v1491
        %v1493 = vsel %vm942, %v1490, 0.0
        %1494 = vadd.xlane.f32.xlu0 %v1493
        %v1495 = vpop.xlane.xlu0 %1494
        %v1496 = vsel %vm942, %v1492, 0.0
        %1497 = vadd.xlane.f32.xlu0 %v1496
        %v1498 = vpop.xlane.xlu0 %1497
        %v1499 = vrcp.pop %v1495
        %v1500 = vrcp.pop %v1498
        %v1501 = vmul.f32 %v1490, %v1499
        %v1502 = vmul.f32 %v1492, %v1500
        %v1503 = vpack.c.bf16 %v1501, %v1501
        %v1504 = vpack.c.bf16 %v1502, %v1502
        %1505 = vrot.lane.b32.xlu0 %v937, 48
        %v1506 = vpop.permute.xlu0 %1505
        %v1508 = vsel %vm942, %v1503, 0
        %v1511 = vsel %vm1067, %v1506, 0
        %1513 = vmatprep.subr.bf16.mxu0 0
        %1514 = vmatpush1.bf16.msra.mxu0 %v1511
        %1515 = vmatprep.subr.bf16.mxu0 0
        %1516 = vmatpush1.bf16.msra.mxu0 0
        %1517 = vmatprep.subr.bf16.mxu0 0
        %1518 = vmatpush1.bf16.msra.mxu0 0
        %1519 = vmatprep.subr.bf16.mxu0 0
        %1520 = vmatpush1.bf16.msra.mxu0 0
        %1521 = vmatprep.subr.bf16.mxu0 0
        %1522 = vmatpush1.bf16.msra.mxu0 0
        %1523 = vmatprep.subr.bf16.mxu0 0
        %1524 = vmatpush1.bf16.msra.mxu0 0
        %1525 = vmatprep.subr.bf16.mxu0 0
        %1526 = vmatpush1.bf16.msra.mxu0 0
        %1527 = vmatprep.subr.bf16.mxu0 0
        %1528 = vmatpush1.bf16.msra.mxu0 0
        %1529 = vmatprep.subr.bf16.mxu0 0
        %1530 = vmatpush1.bf16.msra.mxu0 0
        %1531 = vmatprep.subr.bf16.mxu0 0
        %1532 = vmatpush1.bf16.msra.mxu0 0
        %1533 = vmatprep.subr.bf16.mxu0 0
        %1534 = vmatpush1.bf16.msra.mxu0 0
        %1535 = vmatprep.subr.bf16.mxu0 0
        %1536 = vmatpush1.bf16.msra.mxu0 0
        %1537 = vmatprep.subr.bf16.mxu0 0
        %1538 = vmatpush1.bf16.msra.mxu0 0
        %1539 = vmatprep.subr.bf16.mxu0 0
        %1540 = vmatpush1.bf16.msra.mxu0 0
        %1541 = vmatprep.subr.bf16.mxu0 0
        %1542 = vmatpush1.bf16.msra.mxu0 0
        %1543 = vmatprep.subr.bf16.mxu0 0
        %1544 = vmatpush1.bf16.msra.mxu0 0
        %1545 = vmatprep.mubr.bf16.mxu0 0
        %1546 = vmatmul.mubr.bf16.gmra.mrb[0].mxu0 %v1508
        %v1547 = vpop.f32.mrb[0].mxu0
        %v1548 = vadd.f32 0.0, %v1547
        %v1549 = vpop.f32.mrb[0].mxu0
        %v1550 = vpop.f32.mrb[0].mxu0
        %v1551 = vpop.f32.mrb[0].mxu0
        %1552 = vdwg.mxu0
        %1553 = vrot.lane.b32.xlu0 %v938, 48
        %v1554 = vpop.permute.xlu0 %1553
        %v1556 = vsel %vm942, %v1504, 0
        %v1559 = vsel %vm1067, %v1554, 0
        %1561 = vmatprep.subr.bf16.mxu0 0
        %1562 = vmatpush1.bf16.msra.mxu0 %v1559
        %1563 = vmatprep.subr.bf16.mxu0 0
        %1564 = vmatpush1.bf16.msra.mxu0 0
        %1565 = vmatprep.subr.bf16.mxu0 0
        %1566 = vmatpush1.bf16.msra.mxu0 0
        %1567 = vmatprep.subr.bf16.mxu0 0
        %1568 = vmatpush1.bf16.msra.mxu0 0
        %1569 = vmatprep.subr.bf16.mxu0 0
        %1570 = vmatpush1.bf16.msra.mxu0 0
        %1571 = vmatprep.subr.bf16.mxu0 0
        %1572 = vmatpush1.bf16.msra.mxu0 0
        %1573 = vmatprep.subr.bf16.mxu0 0
        %1574 = vmatpush1.bf16.msra.mxu0 0
        %1575 = vmatprep.subr.bf16.mxu0 0
        %1576 = vmatpush1.bf16.msra.mxu0 0
        %1577 = vmatprep.subr.bf16.mxu0 0
        %1578 = vmatpush1.bf16.msra.mxu0 0
        %1579 = vmatprep.subr.bf16.mxu0 0
        %1580 = vmatpush1.bf16.msra.mxu0 0
        %1581 = vmatprep.subr.bf16.mxu0 0
        %1582 = vmatpush1.bf16.msra.mxu0 0
        %1583 = vmatprep.subr.bf16.mxu0 0
        %1584 = vmatpush1.bf16.msra.mxu0 0
        %1585 = vmatprep.subr.bf16.mxu0 0
        %1586 = vmatpush1.bf16.msra.mxu0 0
        %1587 = vmatprep.subr.bf16.mxu0 0
        %1588 = vmatpush1.bf16.msra.mxu0 0
        %1589 = vmatprep.subr.bf16.mxu0 0
        %1590 = vmatpush1.bf16.msra.mxu0 0
        %1591 = vmatprep.subr.bf16.mxu0 0
        %1592 = vmatpush1.bf16.msra.mxu0 0
        %1593 = vmatprep.mubr.bf16.mxu0 0
        %1594 = vmatmul.mubr.bf16.gmra.mrb[0].mxu0 %v1556
        %v1595 = vpop.f32.mrb[0].mxu0
        %v1596 = vadd.f32 0.0, %v1595
        %v1597 = vpop.f32.mrb[0].mxu0
        %v1598 = vpop.f32.mrb[0].mxu0
        %v1599 = vpop.f32.mrb[0].mxu0
        %1600 = vdwg.mxu0
        %1601 = vrot.lane.b32.xlu0 %v935, 104
        %v1602 = vpop.permute.xlu0 %1601
        %1603 = vrot.lane.b32.xlu0 %v937, 72
        %v1604 = vpop.permute.xlu0 %1603
        %v1606 = vsel %vm942, %v1602, 0
        %v1609 = vsel %vm942, %v1604, 0
        %1611 = vmatprep.subr.bf16.mxu0 0
        %1612 = vmatpush1.bf16.xpose.msra.mxu0 %v1609
        %1613 = vmatprep.subr.bf16.mxu0 0
        %1614 = vmatpush1.bf16.xpose.msra.mxu0 0
        %1615 = vmatprep.subr.bf16.mxu0 0
        %1616 = vmatpush1.bf16.xpose.msra.mxu0 0
        %1617 = vmatprep.subr.bf16.mxu0 0
        %1618 = vmatpush1.bf16.xpose.msra.mxu0 0
        %1619 = vmatprep.subr.bf16.mxu0 0
        %1620 = vmatpush1.bf16.xpose.msra.mxu0 0
        %1621 = vmatprep.subr.bf16.mxu0 0
        %1622 = vmatpush1.bf16.xpose.msra.mxu0 0
        %1623 = vmatprep.subr.bf16.mxu0 0
        %1624 = vmatpush1.bf16.xpose.msra.mxu0 0
        %1625 = vmatprep.subr.bf16.mxu0 0
        %1626 = vmatpush1.bf16.xpose.msra.mxu0 0
        %1627 = vmatprep.subr.bf16.mxu0 0
        %1628 = vmatpush1.bf16.xpose.msra.mxu0 0
        %1629 = vmatprep.subr.bf16.mxu0 0
        %1630 = vmatpush1.bf16.xpose.msra.mxu0 0
        %1631 = vmatprep.subr.bf16.mxu0 0
        %1632 = vmatpush1.bf16.xpose.msra.mxu0 0
        %1633 = vmatprep.subr.bf16.mxu0 0
        %1634 = vmatpush1.bf16.xpose.msra.mxu0 0
        %1635 = vmatprep.subr.bf16.mxu0 0
        %1636 = vmatpush1.bf16.xpose.msra.mxu0 0
        %1637 = vmatprep.subr.bf16.mxu0 0
        %1638 = vmatpush1.bf16.xpose.msra.mxu0 0
        %1639 = vmatprep.subr.bf16.mxu0 0
        %1640 = vmatpush1.bf16.xpose.msra.mxu0 0
        %1641 = vmatprep.subr.bf16.mxu0 0
        %1642 = vmatpush1.bf16.xpose.msra.mxu0 0
        %1643 = vmatprep.mubr.bf16.mxu0 0
        %1644 = vmatmul.mubr.bf16.gmra.mrb[0].mxu0 %v1606
        %v1645 = vpop.f32.mrb[0].mxu0
        %v1646 = vadd.f32 0.0, %v1645
        %v1647 = vpop.f32.mrb[0].mxu0
        %v1648 = vpop.f32.mrb[0].mxu0
        %v1649 = vpop.f32.mrb[0].mxu0
        %1650 = vdwg.mxu0
        %1651 = vrot.lane.b32.xlu0 %v936, 104
        %v1652 = vpop.permute.xlu0 %1651
        %1653 = vrot.lane.b32.xlu0 %v938, 72
        %v1654 = vpop.permute.xlu0 %1653
        %v1656 = vsel %vm942, %v1652, 0
        %v1659 = vsel %vm942, %v1654, 0
        %1661 = vmatprep.subr.bf16.mxu0 0
        %1662 = vmatpush1.bf16.xpose.msra.mxu0 %v1659
        %1663 = vmatprep.subr.bf16.mxu0 0
        %1664 = vmatpush1.bf16.xpose.msra.mxu0 0
        %1665 = vmatprep.subr.bf16.mxu0 0
        %1666 = vmatpush1.bf16.xpose.msra.mxu0 0
        %1667 = vmatprep.subr.bf16.mxu0 0
        %1668 = vmatpush1.bf16.xpose.msra.mxu0 0
        %1669 = vmatprep.subr.bf16.mxu0 0
        %1670 = vmatpush1.bf16.xpose.msra.mxu0 0
        %1671 = vmatprep.subr.bf16.mxu0 0
        %1672 = vmatpush1.bf16.xpose.msra.mxu0 0
        %1673 = vmatprep.subr.bf16.mxu0 0
        %1674 = vmatpush1.bf16.xpose.msra.mxu0 0
        %1675 = vmatprep.subr.bf16.mxu0 0
        %1676 = vmatpush1.bf16.xpose.msra.mxu0 0
        %1677 = vmatprep.subr.bf16.mxu0 0
        %1678 = vmatpush1.bf16.xpose.msra.mxu0 0
        %1679 = vmatprep.subr.bf16.mxu0 0
        %1680 = vmatpush1.bf16.xpose.msra.mxu0 0
        %1681 = vmatprep.subr.bf16.mxu0 0
        %1682 = vmatpush1.bf16.xpose.msra.mxu0 0
        %1683 = vmatprep.subr.bf16.mxu0 0
        %1684 = vmatpush1.bf16.xpose.msra.mxu0 0
        %1685 = vmatprep.subr.bf16.mxu0 0
        %1686 = vmatpush1.bf16.xpose.msra.mxu0 0
        %1687 = vmatprep.subr.bf16.mxu0 0
        %1688 = vmatpush1.bf16.xpose.msra.mxu0 0
        %1689 = vmatprep.subr.bf16.mxu0 0
        %1690 = vmatpush1.bf16.xpose.msra.mxu0 0
        %1691 = vmatprep.subr.bf16.mxu0 0
        %1692 = vmatpush1.bf16.xpose.msra.mxu0 0
        %1693 = vmatprep.mubr.bf16.mxu0 0
        %1694 = vmatmul.mubr.bf16.gmra.mrb[0].mxu0 %v1656
        %v1695 = vpop.f32.mrb[0].mxu0
        %v1696 = vadd.f32 0.0, %v1695
        %v1697 = vpop.f32.mrb[0].mxu0
        %v1698 = vpop.f32.mrb[0].mxu0
        %v1699 = vpop.f32.mrb[0].mxu0
        %1700 = vdwg.mxu0
        %v1701 = vsel %vm942, %v1646, -inf
        %1702 = vmax.xlane.f32.xlu0 %v1701
        %v1703 = vpop.xlane.xlu0 %1702
        %v1704 = vsel %vm942, %v1696, -inf
        %1705 = vmax.xlane.f32.xlu0 %v1704
        %v1706 = vpop.xlane.xlu0 %1705
        %v1707 = vsub.f32 %v1646, %v1703
        %v1708 = vsub.f32 %v1696, %v1706
        %v1709 = vmul.f32 %v1707, 1.442695
        %v1710 = vpow.pop %v1709
        %v1711 = vmul.f32 %v1708, 1.442695
        %v1712 = vpow.pop %v1711
        %v1713 = vsel %vm942, %v1710, 0.0
        %1714 = vadd.xlane.f32.xlu0 %v1713
        %v1715 = vpop.xlane.xlu0 %1714
        %v1716 = vsel %vm942, %v1712, 0.0
        %1717 = vadd.xlane.f32.xlu0 %v1716
        %v1718 = vpop.xlane.xlu0 %1717
        %v1719 = vrcp.pop %v1715
        %v1720 = vrcp.pop %v1718
        %v1721 = vmul.f32 %v1710, %v1719
        %v1722 = vmul.f32 %v1712, %v1720
        %v1723 = vpack.c.bf16 %v1721, %v1721
        %v1724 = vpack.c.bf16 %v1722, %v1722
        %1725 = vrot.lane.b32.xlu0 %v937, 40
        %v1726 = vpop.permute.xlu0 %1725
        %v1728 = vsel %vm942, %v1723, 0
        %v1731 = vsel %vm1067, %v1726, 0
        %1733 = vmatprep.subr.bf16.mxu0 0
        %1734 = vmatpush1.bf16.msra.mxu0 %v1731
        %1735 = vmatprep.subr.bf16.mxu0 0
        %1736 = vmatpush1.bf16.msra.mxu0 0
        %1737 = vmatprep.subr.bf16.mxu0 0
        %1738 = vmatpush1.bf16.msra.mxu0 0
        %1739 = vmatprep.subr.bf16.mxu0 0
        %1740 = vmatpush1.bf16.msra.mxu0 0
        %1741 = vmatprep.subr.bf16.mxu0 0
        %1742 = vmatpush1.bf16.msra.mxu0 0
        %1743 = vmatprep.subr.bf16.mxu0 0
        %1744 = vmatpush1.bf16.msra.mxu0 0
        %1745 = vmatprep.subr.bf16.mxu0 0
        %1746 = vmatpush1.bf16.msra.mxu0 0
        %1747 = vmatprep.subr.bf16.mxu0 0
        %1748 = vmatpush1.bf16.msra.mxu0 0
        %1749 = vmatprep.subr.bf16.mxu0 0
        %1750 = vmatpush1.bf16.msra.mxu0 0
        %1751 = vmatprep.subr.bf16.mxu0 0
        %1752 = vmatpush1.bf16.msra.mxu0 0
        %1753 = vmatprep.subr.bf16.mxu0 0
        %1754 = vmatpush1.bf16.msra.mxu0 0
        %1755 = vmatprep.subr.bf16.mxu0 0
        %1756 = vmatpush1.bf16.msra.mxu0 0
        %1757 = vmatprep.subr.bf16.mxu0 0
        %1758 = vmatpush1.bf16.msra.mxu0 0
        %1759 = vmatprep.subr.bf16.mxu0 0
        %1760 = vmatpush1.bf16.msra.mxu0 0
        %1761 = vmatprep.subr.bf16.mxu0 0
        %1762 = vmatpush1.bf16.msra.mxu0 0
        %1763 = vmatprep.subr.bf16.mxu0 0
        %1764 = vmatpush1.bf16.msra.mxu0 0
        %1765 = vmatprep.mubr.bf16.mxu0 0
        %1766 = vmatmul.mubr.bf16.gmra.mrb[0].mxu0 %v1728
        %v1767 = vpop.f32.mrb[0].mxu0
        %v1768 = vadd.f32 0.0, %v1767
        %v1769 = vpop.f32.mrb[0].mxu0
        %v1770 = vpop.f32.mrb[0].mxu0
        %v1771 = vpop.f32.mrb[0].mxu0
        %1772 = vdwg.mxu0
        %1773 = vrot.lane.b32.xlu0 %v938, 40
        %v1774 = vpop.permute.xlu0 %1773
        %v1776 = vsel %vm942, %v1724, 0
        %v1779 = vsel %vm1067, %v1774, 0
        %1781 = vmatprep.subr.bf16.mxu0 0
        %1782 = vmatpush1.bf16.msra.mxu0 %v1779
        %1783 = vmatprep.subr.bf16.mxu0 0
        %1784 = vmatpush1.bf16.msra.mxu0 0
        %1785 = vmatprep.subr.bf16.mxu0 0
        %1786 = vmatpush1.bf16.msra.mxu0 0
        %1787 = vmatprep.subr.bf16.mxu0 0
        %1788 = vmatpush1.bf16.msra.mxu0 0
        %1789 = vmatprep.subr.bf16.mxu0 0
        %1790 = vmatpush1.bf16.msra.mxu0 0
        %1791 = vmatprep.subr.bf16.mxu0 0
        %1792 = vmatpush1.bf16.msra.mxu0 0
        %1793 = vmatprep.subr.bf16.mxu0 0
        %1794 = vmatpush1.bf16.msra.mxu0 0
        %1795 = vmatprep.subr.bf16.mxu0 0
        %1796 = vmatpush1.bf16.msra.mxu0 0
        %1797 = vmatprep.subr.bf16.mxu0 0
        %1798 = vmatpush1.bf16.msra.mxu0 0
        %1799 = vmatprep.subr.bf16.mxu0 0
        %1800 = vmatpush1.bf16.msra.mxu0 0
        %1801 = vmatprep.subr.bf16.mxu0 0
        %1802 = vmatpush1.bf16.msra.mxu0 0
        %1803 = vmatprep.subr.bf16.mxu0 0
        %1804 = vmatpush1.bf16.msra.mxu0 0
        %1805 = vmatprep.subr.bf16.mxu0 0
        %1806 = vmatpush1.bf16.msra.mxu0 0
        %1807 = vmatprep.subr.bf16.mxu0 0
        %1808 = vmatpush1.bf16.msra.mxu0 0
        %1809 = vmatprep.subr.bf16.mxu0 0
        %1810 = vmatpush1.bf16.msra.mxu0 0
        %1811 = vmatprep.subr.bf16.mxu0 0
        %1812 = vmatpush1.bf16.msra.mxu0 0
        %1813 = vmatprep.mubr.bf16.mxu0 0
        %1814 = vmatmul.mubr.bf16.gmra.mrb[0].mxu0 %v1776
        %v1815 = vpop.f32.mrb[0].mxu0
        %v1816 = vadd.f32 0.0, %v1815
        %v1817 = vpop.f32.mrb[0].mxu0
        %v1818 = vpop.f32.mrb[0].mxu0
        %v1819 = vpop.f32.mrb[0].mxu0
        %1820 = vdwg.mxu0
        %1823 = vrot.lane.b32.xlu0 %v1328, 8
        %v1824 = vpop.permute.xlu0 %1823
        %1825 = vrot.lane.b32.xlu0 %v1376, 8
        %v1826 = vpop.permute.xlu0 %1825
        %1831 = vrot.lane.b32.xlu0 %v1548, 16
        %v1832 = vpop.permute.xlu0 %1831
        %1833 = vrot.lane.b32.xlu0 %v1596, 16
        %v1834 = vpop.permute.xlu0 %1833
        %1839 = vrot.lane.b32.xlu0 %v1768, 24
        %v1840 = vpop.permute.xlu0 %1839
        %1841 = vrot.lane.b32.xlu0 %v1816, 24
        %v1842 = vpop.permute.xlu0 %1841
        %v1845 = vsel %vm942, %v1106, %v1824
        %v1846 = vsel %vm942, %v1154, %v1826
        %vm1847 = vcmask 130048
        %v1848 = vsel %vm1847, %v1845, %v1832
        %v1849 = vsel %vm1847, %v1846, %v1834
        %vm1850 = vcmask 195584
        %v1851 = vsel %vm1850, %v1848, %v1840
        %v1852 = vsel %vm1850, %v1849, %v1842
        %v1853 = vld [vmem:[%s756] sm:$0xf]
        %v1854 = vld [vmem:[%s756 + $0x4] sm:$0xf]
        %v1855 = vld [vmem:[%s756 + $0x8] sm:$0xf]
        %v1856 = vld [vmem:[%s756 + $0xc] sm:$0xf]
        %v1857 = vld [vmem:[%s759] sm:$0x1]
        %v1858 = vpack.c.bf16 %v1852, %v1851
        %v1860 = vlaneseq
        %v1861 = vshrl.u32 %v1860, 7
        %v1862 = vsub.s32 0, %v1861
        %v1863 = vrot.slane %v1857, %v1862
        %v1869 = vunpack.c.l.b16 %v1853
        %v1870 = vunpack.c.l.b16 %v1854
        %v1871 = vunpack.c.l.b16 %v1855
        %v1872 = vunpack.c.l.b16 %v1856
        %v1873 = vpack.c.b16 %v1870, %v1869
        %v1874 = vpack.c.b16 %v1872, %v1871
        %v1878 = vsel %vm888, %v1858, 0
        %1880 = vmatprep.subr.bf16.mxu0 0
        %1881 = vmatpush1.bf16.msra.mxu0 %v1873
        %1882 = vmatprep.subr.bf16.mxu0 0
        %1883 = vmatpush1.bf16.msra.mxu0 %v1874
        %1884 = vmatprep.subr.bf16.mxu0 0
        %1885 = vmatpush1.bf16.msra.mxu0 0
        %1886 = vmatprep.subr.bf16.mxu0 0
        %1887 = vmatpush1.bf16.msra.mxu0 0
        %1888 = vmatprep.subr.bf16.mxu0 0
        %1889 = vmatpush1.bf16.msra.mxu0 0
        %1890 = vmatprep.subr.bf16.mxu0 0
        %1891 = vmatpush1.bf16.msra.mxu0 0
        %1892 = vmatprep.subr.bf16.mxu0 0
        %1893 = vmatpush1.bf16.msra.mxu0 0
        %1894 = vmatprep.subr.bf16.mxu0 0
        %1895 = vmatpush1.bf16.msra.mxu0 0
        %1896 = vmatprep.subr.bf16.mxu0 0
        %1897 = vmatpush1.bf16.msra.mxu0 0
        %1898 = vmatprep.subr.bf16.mxu0 0
        %1899 = vmatpush1.bf16.msra.mxu0 0
        %1900 = vmatprep.subr.bf16.mxu0 0
        %1901 = vmatpush1.bf16.msra.mxu0 0
        %1902 = vmatprep.subr.bf16.mxu0 0
        %1903 = vmatpush1.bf16.msra.mxu0 0
        %1904 = vmatprep.subr.bf16.mxu0 0
        %1905 = vmatpush1.bf16.msra.mxu0 0
        %1906 = vmatprep.subr.bf16.mxu0 0
        %1907 = vmatpush1.bf16.msra.mxu0 0
        %1908 = vmatprep.subr.bf16.mxu0 0
        %1909 = vmatpush1.bf16.msra.mxu0 0
        %1910 = vmatprep.subr.bf16.mxu0 0
        %1911 = vmatpush1.bf16.msra.mxu0 0
        %1912 = vmatprep.mubr.bf16.mxu0 0
        %1913 = vmatmul.mubr.bf16.gmra.mrb[0].mxu0 %v1878
        %v1914 = vpop.f32.mrb[0].mxu0
        %v1915 = vadd.f32 %v1863, %v1914
        %v1916 = vpop.f32.mrb[0].mxu0
        %v1917 = vpop.f32.mrb[0].mxu0
        %v1918 = vadd.f32 %v1863, %v1917
        %v1919 = vpop.f32.mrb[0].mxu0
        %1920 = vdwg.mxu0
        %v1921 = vadd.f32 %v862, %v1915
        %v1922 = vadd.f32 %v863, %v1918
        %v1923 = vld [vmem:[%s762] sm:$0x1]
        %v1924 = vld [vmem:[%s765] sm:$0x1]
        %v1925 = vsel %vm888, %v1921, 0.0
        %1926 = vadd.xlane.f32.xlu0 %v1925
        %v1927 = vpop.xlane.xlu0 %1926
        %v1928 = vsel %vm888, %v1922, 0.0
        %1929 = vadd.xlane.f32.xlu0 %v1928
        %v1930 = vpop.xlane.xlu0 %1929
        %v1931 = vrcp.pop 32.0
        %v1932 = vmul.f32 %v1927, %v1931
        %v1933 = vmul.f32 %v1930, %v1931
        %v1934 = vsub.f32 %v1921, %v1932
        %v1935 = vsub.f32 %v1922, %v1933
        %v1936 = vmul.f32 %v1934, %v1934
        %v1937 = vmul.f32 %v1935, %v1935
        %v1938 = vsel %vm888, %v1936, 0.0
        %1939 = vadd.xlane.f32.xlu0 %v1938
        %v1940 = vpop.xlane.xlu0 %1939
        %v1941 = vsel %vm888, %v1937, 0.0
        %1942 = vadd.xlane.f32.xlu0 %v1941
        %v1943 = vpop.xlane.xlu0 %1942
        %v1944 = vmul.f32 %v1940, %v1931
        %v1945 = vmul.f32 %v1943, %v1931
        %v1946 = vadd.f32 %v1944, 1e-05
        %v1947 = vadd.f32 %v1945, 1e-05
        %v1948 = vrsqrt.pop %v1946
        %v1949 = vrsqrt.pop %v1947
        %v1950 = vmul.f32 %v1934, %v1948
        %v1951 = vmul.f32 %v1935, %v1949
        %v1953 = vlaneseq
        %v1954 = vshrl.u32 %v1953, 7
        %v1955 = vsub.s32 0, %v1954
        %v1956 = vrot.slane %v1923, %v1955
        %v1958 = vmul.f32 %v1950, %v1956
        %v1959 = vmul.f32 %v1951, %v1956
        %v1961 = vlaneseq
        %v1962 = vshrl.u32 %v1961, 7
        %v1963 = vsub.s32 0, %v1962
        %v1964 = vrot.slane %v1924, %v1963
        %v1966 = vadd.f32 %v1958, %v1964
        %v1967 = vadd.f32 %v1959, %v1964
        %v1968 = vld [vmem:[%s770] sm:$0xf]
        %v1969 = vld [vmem:[%s770 + $0x4] sm:$0xf]
        %v1970 = vld [vmem:[%s770 + $0x8] sm:$0xf]
        %v1971 = vld [vmem:[%s770 + $0xc] sm:$0xf]
        %v1972 = vld [vmem:[%s773] sm:$0x1]
        %v1973 = vpack.c.bf16 %v1967, %v1966
        %v1975 = vlaneseq
        %v1976 = vshrl.u32 %v1975, 7
        %v1977 = vsub.s32 0, %v1976
        %v1978 = vrot.slane %v1972, %v1977
        %v1984 = vunpack.c.l.b16 %v1968
        %v1985 = vunpack.c.l.b16 %v1969
        %v1986 = vunpack.c.l.b16 %v1970
        %v1987 = vunpack.c.l.b16 %v1971
        %v1988 = vpack.c.b16 %v1985, %v1984
        %v1989 = vpack.c.b16 %v1987, %v1986
        %v1993 = vsel %vm888, %v1973, 0
        %1995 = vmatprep.subr.bf16.mxu0 0
        %1996 = vmatpush1.bf16.msra.mxu0 %v1988
        %1997 = vmatprep.subr.bf16.mxu0 0
        %1998 = vmatpush1.bf16.msra.mxu0 %v1989
        %1999 = vmatprep.subr.bf16.mxu0 0
        %2000 = vmatpush1.bf16.msra.mxu0 0
        %2001 = vmatprep.subr.bf16.mxu0 0
        %2002 = vmatpush1.bf16.msra.mxu0 0
        %2003 = vmatprep.subr.bf16.mxu0 0
        %2004 = vmatpush1.bf16.msra.mxu0 0
        %2005 = vmatprep.subr.bf16.mxu0 0
        %2006 = vmatpush1.bf16.msra.mxu0 0
        %2007 = vmatprep.subr.bf16.mxu0 0
        %2008 = vmatpush1.bf16.msra.mxu0 0
        %2009 = vmatprep.subr.bf16.mxu0 0
        %2010 = vmatpush1.bf16.msra.mxu0 0
        %2011 = vmatprep.subr.bf16.mxu0 0
        %2012 = vmatpush1.bf16.msra.mxu0 0
        %2013 = vmatprep.subr.bf16.mxu0 0
        %2014 = vmatpush1.bf16.msra.mxu0 0
        %2015 = vmatprep.subr.bf16.mxu0 0
        %2016 = vmatpush1.bf16.msra.mxu0 0
        %2017 = vmatprep.subr.bf16.mxu0 0
        %2018 = vmatpush1.bf16.msra.mxu0 0
        %2019 = vmatprep.subr.bf16.mxu0 0
        %2020 = vmatpush1.bf16.msra.mxu0 0
        %2021 = vmatprep.subr.bf16.mxu0 0
        %2022 = vmatpush1.bf16.msra.mxu0 0
        %2023 = vmatprep.subr.bf16.mxu0 0
        %2024 = vmatpush1.bf16.msra.mxu0 0
        %2025 = vmatprep.subr.bf16.mxu0 0
        %2026 = vmatpush1.bf16.msra.mxu0 0
        %2027 = vmatprep.mubr.bf16.mxu0 0
        %2028 = vmatmul.mubr.bf16.gmra.mrb[0].mxu0 %v1993
        %v2029 = vpop.f32.mrb[0].mxu0
        %v2030 = vadd.f32 %v1978, %v2029
        %v2031 = vpop.f32.mrb[0].mxu0
        %v2032 = vpop.f32.mrb[0].mxu0
        %v2033 = vadd.f32 %v1978, %v2032
        %v2034 = vpop.f32.mrb[0].mxu0
        %2035 = vdwg.mxu0
        %v2036 = vmax.f32 %v2030, 0.0
        %v2037 = vmax.f32 %v2033, 0.0
        %v2038 = vld [vmem:[%s778] sm:$0xf]
        %v2039 = vld [vmem:[%s778 + $0x4] sm:$0xf]
        %v2040 = vld [vmem:[%s778 + $0x8] sm:$0xf]
        %v2041 = vld [vmem:[%s778 + $0xc] sm:$0xf]
        %v2042 = vld [vmem:[%s778 + $0x10] sm:$0xf]
        %v2043 = vld [vmem:[%s778 + $0x14] sm:$0xf]
        %v2044 = vld [vmem:[%s778 + $0x18] sm:$0xf]
        %v2045 = vld [vmem:[%s778 + $0x1c] sm:$0xf]
        %v2046 = vld [vmem:[%s778 + $0x20] sm:$0xf]
        %v2047 = vld [vmem:[%s778 + $0x24] sm:$0xf]
        %v2048 = vld [vmem:[%s778 + $0x28] sm:$0xf]
        %v2049 = vld [vmem:[%s778 + $0x2c] sm:$0xf]
        %v2050 = vld [vmem:[%s778 + $0x30] sm:$0xf]
        %v2051 = vld [vmem:[%s778 + $0x34] sm:$0xf]
        %v2052 = vld [vmem:[%s778 + $0x38] sm:$0xf]
        %v2053 = vld [vmem:[%s778 + $0x3c] sm:$0xf]
        %v2054 = vld [vmem:[%s781] sm:$0x1]
        %v2055 = vpack.c.bf16 %v2037, %v2036
        %v2057 = vlaneseq
        %v2058 = vshrl.u32 %v2057, 7
        %v2059 = vsub.s32 0, %v2058
        %v2060 = vrot.slane %v2054, %v2059
        %v2078 = vunpack.c.l.b16 %v2038
        %v2079 = vunpack.c.l.b16 %v2039
        %v2080 = vunpack.c.l.b16 %v2040
        %v2081 = vunpack.c.l.b16 %v2041
        %v2082 = vunpack.c.l.b16 %v2042
        %v2083 = vunpack.c.l.b16 %v2043
        %v2084 = vunpack.c.l.b16 %v2044
        %v2085 = vunpack.c.l.b16 %v2045
        %v2086 = vunpack.c.l.b16 %v2046
        %v2087 = vunpack.c.l.b16 %v2047
        %v2088 = vunpack.c.l.b16 %v2048
        %v2089 = vunpack.c.l.b16 %v2049
        %v2090 = vunpack.c.l.b16 %v2050
        %v2091 = vunpack.c.l.b16 %v2051
        %v2092 = vunpack.c.l.b16 %v2052
        %v2093 = vunpack.c.l.b16 %v2053
        %v2094 = vpack.c.b16 %v2079, %v2078
        %v2095 = vpack.c.b16 %v2081, %v2080
        %v2096 = vpack.c.b16 %v2083, %v2082
        %v2097 = vpack.c.b16 %v2085, %v2084
        %v2098 = vpack.c.b16 %v2087, %v2086
        %v2099 = vpack.c.b16 %v2089, %v2088
        %v2100 = vpack.c.b16 %v2091, %v2090
        %v2101 = vpack.c.b16 %v2093, %v2092
        %2110 = vmatprep.subr.bf16.mxu0 0
        %2111 = vmatpush1.bf16.msra.mxu0 %v2094
        %2112 = vmatprep.subr.bf16.mxu0 0
        %2113 = vmatpush1.bf16.msra.mxu0 %v2095
        %2114 = vmatprep.subr.bf16.mxu0 0
        %2115 = vmatpush1.bf16.msra.mxu0 %v2096
        %2116 = vmatprep.subr.bf16.mxu0 0
        %2117 = vmatpush1.bf16.msra.mxu0 %v2097
        %2118 = vmatprep.subr.bf16.mxu0 0
        %2119 = vmatpush1.bf16.msra.mxu0 %v2098
        %2120 = vmatprep.subr.bf16.mxu0 0
        %2121 = vmatpush1.bf16.msra.mxu0 %v2099
        %2122 = vmatprep.subr.bf16.mxu0 0
        %2123 = vmatpush1.bf16.msra.mxu0 %v2100
        %2124 = vmatprep.subr.bf16.mxu0 0
        %2125 = vmatpush1.bf16.msra.mxu0 %v2101
        %2126 = vmatprep.subr.bf16.mxu0 0
        %2127 = vmatpush1.bf16.msra.mxu0 0
        %2128 = vmatprep.subr.bf16.mxu0 0
        %2129 = vmatpush1.bf16.msra.mxu0 0
        %2130 = vmatprep.subr.bf16.mxu0 0
        %2131 = vmatpush1.bf16.msra.mxu0 0
        %2132 = vmatprep.subr.bf16.mxu0 0
        %2133 = vmatpush1.bf16.msra.mxu0 0
        %2134 = vmatprep.subr.bf16.mxu0 0
        %2135 = vmatpush1.bf16.msra.mxu0 0
        %2136 = vmatprep.subr.bf16.mxu0 0
        %2137 = vmatpush1.bf16.msra.mxu0 0
        %2138 = vmatprep.subr.bf16.mxu0 0
        %2139 = vmatpush1.bf16.msra.mxu0 0
        %2140 = vmatprep.subr.bf16.mxu0 0
        %2141 = vmatpush1.bf16.msra.mxu0 0
        %2142 = vmatprep.mubr.bf16.mxu0 0
        %2143 = vmatmul.mubr.bf16.gmra.mrb[0].mxu0 %v2055
        %v2144 = vpop.f32.mrb[0].mxu0
        %v2145 = vadd.f32 %v2060, %v2144
        %v2146 = vpop.f32.mrb[0].mxu0
        %v2147 = vpop.f32.mrb[0].mxu0
        %v2148 = vadd.f32 %v2060, %v2147
        %v2149 = vpop.f32.mrb[0].mxu0
        %2150 = vdwg.mxu0
        %v2151 = vadd.f32 %v1966, %v2145
        %v2152 = vadd.f32 %v1967, %v2148
        %v2153 = vld [vmem:[%s784] sm:$0x1]
        %v2154 = vld [vmem:[%s787] sm:$0x1]
        %v2155 = vsel %vm888, %v2151, 0.0
        %2156 = vadd.xlane.f32.xlu0 %v2155
        %v2157 = vpop.xlane.xlu0 %2156
        %v2158 = vsel %vm888, %v2152, 0.0
        %2159 = vadd.xlane.f32.xlu0 %v2158
        %v2160 = vpop.xlane.xlu0 %2159
        %v2161 = vmul.f32 %v2157, %v1931
        %v2162 = vmul.f32 %v2160, %v1931
        %v2163 = vsub.f32 %v2151, %v2161
        %v2164 = vsub.f32 %v2152, %v2162
        %v2165 = vmul.f32 %v2163, %v2163
        %v2166 = vmul.f32 %v2164, %v2164
        %v2167 = vsel %vm888, %v2165, 0.0
        %2168 = vadd.xlane.f32.xlu0 %v2167
        %v2169 = vpop.xlane.xlu0 %2168
        %v2170 = vsel %vm888, %v2166, 0.0
        %2171 = vadd.xlane.f32.xlu0 %v2170
        %v2172 = vpop.xlane.xlu0 %2171
        %v2173 = vmul.f32 %v2169, %v1931
        %v2174 = vmul.f32 %v2172, %v1931
        %v2175 = vadd.f32 %v2173, 1e-05
        %v2176 = vadd.f32 %v2174, 1e-05
        %v2177 = vrsqrt.pop %v2175
        %v2178 = vrsqrt.pop %v2176
        %v2179 = vmul.f32 %v2163, %v2177
        %v2180 = vmul.f32 %v2164, %v2178
        %v2182 = vlaneseq
        %v2183 = vshrl.u32 %v2182, 7
        %v2184 = vsub.s32 0, %v2183
        %v2185 = vrot.slane %v2153, %v2184
        %v2187 = vmul.f32 %v2179, %v2185
        %v2188 = vmul.f32 %v2180, %v2185
        %v2190 = vlaneseq
        %v2191 = vshrl.u32 %v2190, 7
        %v2192 = vsub.s32 0, %v2191
        %v2193 = vrot.slane %v2154, %v2192
        %v2195 = vadd.f32 %v2187, %v2193
        %v2196 = vadd.f32 %v2188, %v2193
        %2197 = vst.msk [vmem:[#allocation2] sm:$0xff] %vm888, %v2195
        %2198 = vst.msk [vmem:[#allocation2 + $0x8] sm:$0xff] %vm888, %v2196
        %p2199 = scmp.eq.s32.totalorder %s32, 1
        // Predicated region
        $region105: #{transformer_classifier.1} parent=99 // pred_check
          %p2200 = pneg %p2199
        $region106: #{transformer_classifier.1} parent=99 // pred_check_branch
          %2202 = sbr.rel (%p2200) target = $region108
        $region107: #{transformer_classifier.1} parent=99 // pred_region
          %v2203 = vsel %vm888, %v2195, 0.0
          %v2204 = vrot.slane %v2203, 4
          %v2205 = vadd.f32 %v2203, %v2204
          %v2206 = vrot.slane %v2205, 2
          %v2207 = vadd.f32 %v2205, %v2206
          %v2208 = vrot.slane %v2207, 1
          %v2209 = vadd.f32 %v2207, %v2208
          %v2210 = vsel %vm888, %v2196, 0.0
          %v2211 = vrot.slane %v2210, 4
          %v2212 = vadd.f32 %v2210, %v2211
          %v2213 = vrot.slane %v2212, 2
          %v2214 = vadd.f32 %v2212, %v2213
          %v2215 = vrot.slane %v2214, 1
          %v2216 = vadd.f32 %v2214, %v2215
          %v2217 = vrcp.pop 8.0
          %v2218 = vmul.f32 %v2209, %v2217
          %v2219 = vmul.f32 %v2216, %v2217
          %v2220 = vld [vmem:[%s16] sm:$0x1]
          %v2221 = vld [vmem:[%s17] sm:$0x1]
          %vm2224 = vcmask 1041409
          %v2225 = vsel %vm2224, %v2219, %v2218
          %vm2227 = vcmask 254976
          %v2228 = vsel %vm2227, %v2225, 0.0
          %2229 = vadd.xlane.f32.xlu0 %v2228
          %v2230 = vpop.xlane.xlu0 %2229
          %v2231 = vmul.f32 %v2230, %v1931
          %v2233 = vrot.slane %v2231, 1
          %v2236 = vsub.f32 %v2218, %v2231
          %v2237 = vsub.f32 %v2219, %v2233
          %v2238 = vmul.f32 %v2236, %v2236
          %v2239 = vmul.f32 %v2237, %v2237
          %v2242 = vrot.slane %v2239, 7
          %v2243 = vsel %vm2224, %v2242, %v2238
          %v2245 = vsel %vm2227, %v2243, 0.0
          %2246 = vadd.xlane.f32.xlu0 %v2245
          %v2247 = vpop.xlane.xlu0 %2246
          %v2248 = vmul.f32 %v2247, %v1931
          %v2249 = vadd.f32 %v2248, 1e-05
          %v2250 = vrsqrt.pop %v2249
          %v2252 = vrot.slane %v2250, 1
          %v2255 = vmul.f32 %v2236, %v2250
          %v2256 = vmul.f32 %v2237, %v2252
          %v2258 = vlaneseq
          %v2259 = vshrl.u32 %v2258, 7
          %v2260 = vsub.s32 0, %v2259
          %v2261 = vrot.slane %v2220, %v2260
          %v2263 = vmul.f32 %v2255, %v2261
          %v2264 = vmul.f32 %v2256, %v2261
          %v2266 = vlaneseq
          %v2267 = vshrl.u32 %v2266, 7
          %v2268 = vsub.s32 0, %v2267
          %v2269 = vrot.slane %v2221, %v2268
          %v2271 = vadd.f32 %v2263, %v2269
          %v2272 = vadd.f32 %v2264, %v2269
          %v2273 = vld [vmem:[%s18] sm:$0xf]
          %v2274 = vld [vmem:[%s18 + $0x4] sm:$0xf]
          %v2275 = vld [vmem:[%s18 + $0x8] sm:$0xf]
          %v2276 = vld [vmem:[%s18 + $0xc] sm:$0xf]
          %v2277 = vld [vmem:[%s19] sm:$0x1]
          %v2278 = vpack.c.bf16 %v2271, %v2271
          %v2279 = vpack.c.bf16 %v2272, %v2272
          %v2281 = vlaneseq
          %v2282 = vshrl.u32 %v2281, 7
          %v2283 = vsub.s32 0, %v2282
          %v2284 = vrot.slane %v2277, %v2283
          %v2288 = vunpack.c.l.b16 %v2278
          %v2289 = vunpack.c.l.b16 %v2279
          %v2290 = vrot.slane %v2289, 7
          %v2291 = vsel %vm2224, %v2290, %v2288
          %v2292 = vpack.c.b16 %v2291, %v2291
          %v2297 = vunpack.c.l.b16 %v2273
          %v2298 = vunpack.c.l.b16 %v2274
          %v2299 = vunpack.c.l.b16 %v2275
          %v2300 = vunpack.c.l.b16 %v2276
          %v2301 = vpack.c.b16 %v2298, %v2297
          %v2302 = vpack.c.b16 %v2300, %v2299
          %v2306 = vsel %vm888, %v2292, 0
          %2308 = vmatprep.subr.bf16.mxu0 0
          %2309 = vmatpush1.bf16.msra.mxu0 %v2301
          %2310 = vmatprep.subr.bf16.mxu0 0
          %2311 = vmatpush1.bf16.msra.mxu0 %v2302
          %2312 = vmatprep.subr.bf16.mxu0 0
          %2313 = vmatpush1.bf16.msra.mxu0 0
          %2314 = vmatprep.subr.bf16.mxu0 0
          %2315 = vmatpush1.bf16.msra.mxu0 0
          %2316 = vmatprep.subr.bf16.mxu0 0
          %2317 = vmatpush1.bf16.msra.mxu0 0
          %2318 = vmatprep.subr.bf16.mxu0 0
          %2319 = vmatpush1.bf16.msra.mxu0 0
          %2320 = vmatprep.subr.bf16.mxu0 0
          %2321 = vmatpush1.bf16.msra.mxu0 0
          %2322 = vmatprep.subr.bf16.mxu0 0
          %2323 = vmatpush1.bf16.msra.mxu0 0
          %2324 = vmatprep.subr.bf16.mxu0 0
          %2325 = vmatpush1.bf16.msra.mxu0 0
          %2326 = vmatprep.subr.bf16.mxu0 0
          %2327 = vmatpush1.bf16.msra.mxu0 0
          %2328 = vmatprep.subr.bf16.mxu0 0
          %2329 = vmatpush1.bf16.msra.mxu0 0
          %2330 = vmatprep.subr.bf16.mxu0 0
          %2331 = vmatpush1.bf16.msra.mxu0 0
          %2332 = vmatprep.subr.bf16.mxu0 0
          %2333 = vmatpush1.bf16.msra.mxu0 0
          %2334 = vmatprep.subr.bf16.mxu0 0
          %2335 = vmatpush1.bf16.msra.mxu0 0
          %2336 = vmatprep.subr.bf16.mxu0 0
          %2337 = vmatpush1.bf16.msra.mxu0 0
          %2338 = vmatprep.subr.bf16.mxu0 0
          %2339 = vmatpush1.bf16.msra.mxu0 0
          %2340 = vmatprep.mubr.bf16.mxu0 0
          %2341 = vmatmul.mubr.bf16.gmra.mrb[0].mxu0 %v2306
          %v2342 = vpop.f32.mrb[0].mxu0
          %v2343 = vadd.f32 %v2284, %v2342
          %v2344 = vpop.f32.mrb[0].mxu0
          %v2345 = vpop.f32.mrb[0].mxu0
          %v2346 = vpop.f32.mrb[0].mxu0
          %2347 = vdwg.mxu0
          %vm2348 = vcmask 33792
          %2349 = vst.msk [vmem:[#allocation3] sm:$0x3] %vm2348, %v2343
        $region108: #{transformer_classifier.1} parent=99 // pred_fallthru
          _
        // Predicated region
        $region109: #{transformer_classifier.1} parent=99 // pred_check
          %p2350 = pneg %p525
        $region110: #{transformer_classifier.1} parent=99 // pred_check_branch
          %2352 = sbr.rel (%p2350) target = $region112
        $region111: #{transformer_classifier.1} parent=99 // pred_region
          %s2354 = ssub.s32 32, 32
          %2355 = vsyncadd [#allocation4], %s2354
          %s2357 = sshll.u32 [#allocation3], 4
          %s2358 = int_to_ptr.vmem [resolvable:$true] %s2357
          %2360 = dma.vmem_to_hbm [thread:$0]  %s2358, 32, %s20, [#allocation4]
        $region112: #{transformer_classifier.1} parent=99 // pred_fallthru
          _
        // Predicated region
        $region113: #{transformer_classifier.1} parent=99 // pred_check
          %p2361 = pneg %p525
        $region114: #{transformer_classifier.1} parent=99 // pred_check_branch
          %2363 = sbr.rel (%p2361) target = $region116
        $region115: #{transformer_classifier.1} parent=99 // pred_region
          %2364 = dma.done [#allocation4], 32
        $region116: #{transformer_classifier.1} parent=99 // pred_fallthru
          _
      $region100: #{transformer_classifier.1} parent=5 // pred_fallthru
        _
      %p2365 = scmp.le.s32.totalorder 2, %s27
      // Predicated region
      $region117: #{transformer_classifier.1} parent=5 // pred_check
        %p2366 = pneg %p2365
      $region118: #{transformer_classifier.1} parent=5 // pred_check_branch
        %2368 = sbr.rel (%p2366) target = $region120
      $region119: #{transformer_classifier.1} parent=5 // pred_region
        %s2369 = ssub.s32 %s27, 2
      $region120: #{transformer_classifier.1} parent=5 // pred_fallthru
        _
    $region6: #{transformer_classifier.1} parent=1 // loop_footer
      %s31 = sadd.s32 1, %s27
    $region7: #{transformer_classifier.1} parent=1 // loop_footer_branch
      %26 = sbr.rel target = $region3
    $region8: #{transformer_classifier.1} parent=1 // loop_exit
      _
    %2370 = vsyncpa [#allocation4], 1
    %s2371 = scalar_lea.sflag [#allocation4], 1
    %2372 = vsyncpa %s2371, 1

</llo_original>
